<compile_context>
chip_gen: v7x
topology: tpu7x:2x2x1
jax: 0.10.0
libtpu: 0.0.40
codegen_flags: <defaults>
</compile_context>

<pallas_src>
import functools

import jax
import jax.numpy as jnp
import numpy as np
from jax.experimental import pallas as pl
from jax.experimental.pallas import tpu as pltpu

EPS = 1e-5


def mbconv_kernel(x_ref, s1_ref, b1_ref, wexp_ref, s2_ref, b2_ref, wdw_ref,
                  wse1_ref, bse1_ref, wse2_ref, bse2_ref, s3_ref, b3_ref,
                  wpw_ref, wsc_ref, out_ref, *, H, W):
    B_BLK = x_ref.shape[0]
    HW = x_ref.shape[2]
    Cout = wpw_ref.shape[0]

    # Flat-spatial (lane) validity masks, hoisted once per grid step and shared
    # by the depthwise and shortcut taps of every image in this block.
    lane = jax.lax.broadcasted_iota(jnp.int32, (1, HW), 1)
    col = lane % W
    row_ok = {-1: lane >= W, 0: None, 1: lane < (H - 1) * W}
    col_ok = {-1: col >= 1, 0: None, 1: col <= W - 2}

    taps = []  # (tap_index, flat_offset, validity_mask or None)
    for dy in (-1, 0, 1):
        for dx in (-1, 0, 1):
            m = row_ok[dy]
            if col_ok[dx] is not None:
                m = col_ok[dx] if m is None else (m & col_ok[dx])
            taps.append(((dy + 1) * 3 + (dx + 1), dy * W + dx, m))

    for b in range(B_BLK):
        x = x_ref[b]                                               # (Cin, HW) f32

        # ---- expand_proj (preact): BN -> ReLU -> 1x1 conv (bf16 MXU) ----
        a = jnp.maximum(x * s1_ref[...] + b1_ref[...], 0.0)
        e = jnp.dot(wexp_ref[...], a.astype(jnp.bfloat16),
                    preferred_element_type=jnp.float32)           # (Cexp, HW)

        # ---- depthwise (preact): BN -> ReLU -> 3x3 depthwise conv (pad=1) ----
        # ---- shortcut: 3x3 conv on the original input (same taps / masks) ----
        d = jnp.maximum(e * s2_ref[...] + b2_ref[...], 0.0)
        dw = jnp.zeros_like(d)                                    # (Cexp, HW)
        sc = jnp.zeros((Cout, HW), jnp.float32)                   # (Cout, HW)
        for t, off, m in taps:
            if off == 0:
                d_s, x_s = d, x
            else:
                shift = (-off) % HW                               # lane roll (XLU)
                d_s = pltpu.roll(d, shift, axis=1)
                x_s = pltpu.roll(x, shift, axis=1)
                d_s = jnp.where(m, d_s, 0.0)
                x_s = jnp.where(m, x_s, 0.0)
            dw = dw + d_s * wdw_ref[t]                            # (Cexp,1) bcast, f32
            sc = sc + jnp.dot(wsc_ref[t], x_s.astype(jnp.bfloat16),
                              preferred_element_type=jnp.float32)

        # ---- SE block: global avg pool -> FC -> ReLU -> FC -> sigmoid -> scale ----
        # (tiny; broadcast-multiply + reductions instead of N=1 matmuls)
        s = jnp.mean(dw, axis=1, keepdims=True)                   # (Cexp, 1)
        z = jnp.maximum(
            jnp.sum(wse1_ref[...] * s, axis=0, keepdims=True) + bse1_ref[...],
            0.0)                                                  # (1, Cse)
        g = jax.nn.sigmoid(
            jnp.sum(wse2_ref[...] * z, axis=1, keepdims=True) + bse2_ref[...])
        se = dw * g                                               # (Cexp, HW)

        # ---- pointwise (preact): BN -> (no act) -> 1x1 conv (bf16 MXU) ----
        p = se * s3_ref[...] + b3_ref[...]
        pw = jnp.dot(wpw_ref[...], p.astype(jnp.bfloat16),
                     preferred_element_type=jnp.float32)          # (Cout, HW)

        # DropPath: identity (p=0 / eval mode)
        out_ref[b] = pw + sc


def mbconv_pallas(x_nchw, kp, H, W, b_blk=None):
    B, Cin = x_nchw.shape[0], x_nchw.shape[1]
    Cexp = kp["w_exp"].shape[0]
    Cout = kp["w_pw"].shape[0]
    HW = H * W

    # Images per grid step: amortize the ~0.35us per-step overhead, but keep
    # the grid length >= 2 so both v7x TensorCores get work.
    if b_blk is None:
        b_blk = 1
        for cand in (8, 4, 2):
            if B % cand == 0 and (B // cand) >= 2:
                b_blk = cand
                break
    assert B % b_blk == 0

    # glue: NCHW -> (B, C, H*W) is a pure reshape (no HBM transpose).
    x_flat = x_nchw.reshape(B, Cin, HW)

    args = (x_flat, kp["s1"], kp["b1"], kp["w_exp"], kp["s2"], kp["b2"],
            kp["w_dw"], kp["w_se1"], kp["b_se1"], kp["w_se2"], kp["b_se2"],
            kp["s3"], kp["b3"], kp["w_pw"], kp["w_sc"])

    def _const2(i):
        return (0, 0)

    def _const3(i):
        return (0, 0, 0)

    in_specs = [pl.BlockSpec((b_blk, Cin, HW), lambda i: (i, 0, 0))]
    for arr in args[1:]:
        in_specs.append(pl.BlockSpec(arr.shape, _const3 if arr.ndim == 3 else _const2))

    # VMEM budget from actual (padded, double-buffered) buffers + a generous
    # bound on live intermediates; clamped for v7x's 64 MiB parts.
    def _pad(n, m):
        return ((n + m - 1) // m) * m

    def _padded_bytes(a):
        shp = a.shape[:-2] + (_pad(a.shape[-2], 8), _pad(a.shape[-1], 128))
        return int(np.prod(shp)) * a.dtype.itemsize

    blk_in = b_blk * _pad(Cin, 8) * _pad(HW, 128) * 4
    blk_out = b_blk * _pad(Cout, 8) * _pad(HW, 128) * 4
    params_bytes = sum(_padded_bytes(a) for a in args[1:])
    live = 24 * _pad(Cexp, 8) * _pad(HW, 128) * 4
    vmem_bytes = 2 * (blk_in + blk_out) + 2 * params_bytes + live + (2 << 20)
    vmem_bytes = int(min(max(vmem_bytes, 4 << 20), 32 << 20))

    out = pl.pallas_call(
        functools.partial(mbconv_kernel, H=H, W=W),
        out_shape=jax.ShapeDtypeStruct((B, Cout, HW), jnp.float32),
        grid=(B // b_blk,),
        in_specs=in_specs,
        out_specs=pl.BlockSpec((b_blk, Cout, HW), lambda i: (i, 0, 0)),
        compiler_params=pltpu.CompilerParams(
            dimension_semantics=("parallel",),
            vmem_limit_bytes=vmem_bytes),
    )(*args)

    # glue: (B, Cout, H*W) -> NCHW is a pure reshape.
    return out.reshape(B, Cout, H, W)


# ---------------- pure-JAX reference (NCHW, mirrors the PyTorch module) -------------
def mbconv_reference(x, rp):
    def bn(h, g, b, m, v):
        return g[None, :, None, None] * (h - m[None, :, None, None]) / \
            jnp.sqrt(v[None, :, None, None] + EPS) + b[None, :, None, None]

    def conv(h, w, padding=0, groups=1):
        return jax.lax.conv_general_dilated(
            h, w, window_strides=(1, 1),
            padding=[(padding, padding), (padding, padding)],
            dimension_numbers=("NCHW", "OIHW", "NCHW"),
            feature_group_count=groups,
            precision=jax.lax.Precision.HIGHEST)

    residual = x
    h = conv(jnp.maximum(bn(x, *rp["bn1"]), 0.0), rp["w_exp"])
    h = conv(jnp.maximum(bn(h, *rp["bn2"]), 0.0), rp["w_dw"],
             padding=1, groups=rp["w_dw"].shape[0])
    s = jnp.mean(h, axis=(2, 3), keepdims=True)
    z = jnp.maximum(conv(s, rp["w_se1"]) + rp["b_se1"][None, :, None, None], 0.0)
    g = jax.nn.sigmoid(conv(z, rp["w_se2"]) + rp["b_se2"][None, :, None, None])
    h = h * g
    h = conv(bn(h, *rp["bn3"]), rp["w_pw"])
    sc = conv(residual, rp["w_sc"], padding=1)
    return h + sc


if __name__ == "__main__":
    B, Cin, H, W = 2, 4, 16, 16
    Cout, expansion, ratio = 8, 4, 4
    Cexp = expansion * Cin
    Cse = Cexp // ratio

    key = jax.random.PRNGKey(0)
    ks = list(jax.random.split(key, 16))

    def bn_params(k, C):
        k1, k2, k3, k4 = jax.random.split(k, 4)
        gamma = 1.0 + 0.1 * jax.random.normal(k1, (C,), jnp.float32)
        beta = 0.1 * jax.random.normal(k2, (C,), jnp.float32)
        mean = 0.1 * jax.random.normal(k3, (C,), jnp.float32)
        var = 1.0 + 0.5 * jnp.abs(jax.random.normal(k4, (C,), jnp.float32))
        return gamma, beta, mean, var

    # PyTorch-layout parameters (deterministic, synthetic).
    rp = {
        "bn1": bn_params(ks[0], Cin),
        "w_exp": 0.2 * jax.random.normal(ks[1], (Cexp, Cin, 1, 1), jnp.float32),
        "bn2": bn_params(ks[2], Cexp),
        "w_dw": 0.2 * jax.random.normal(ks[3], (Cexp, 1, 3, 3), jnp.float32),
        "w_se1": 0.2 * jax.random.normal(ks[4], (Cse, Cexp, 1, 1), jnp.float32),
        "b_se1": 0.1 * jax.random.normal(ks[5], (Cse,), jnp.float32),
        "w_se2": 0.2 * jax.random.normal(ks[6], (Cexp, Cse, 1, 1), jnp.float32),
        "b_se2": 0.1 * jax.random.normal(ks[7], (Cexp,), jnp.float32),
        "bn3": bn_params(ks[8], Cexp),
        "w_pw": 0.2 * jax.random.normal(ks[9], (Cout, Cexp, 1, 1), jnp.float32),
        "w_sc": 0.2 * jax.random.normal(ks[10], (Cout, Cin, 3, 3), jnp.float32),
    }

    def bn_affine(gamma, beta, mean, var):
        scale = gamma / jnp.sqrt(var + EPS)
        return scale.reshape(-1, 1), (beta - mean * scale).reshape(-1, 1)

    # Kernel-layout parameters (channels on sublanes, folded BN).
    # Matmul weights are pre-cast to bf16 (f32 accumulation in-kernel);
    # depthwise + SE stay f32.
    s1, b1 = bn_affine(*rp["bn1"])
    s2, b2 = bn_affine(*rp["bn2"])
    s3, b3 = bn_affine(*rp["bn3"])
    kp = {
        "s1": s1, "b1": b1,                                              # (Cin, 1)
        "w_exp": rp["w_exp"][:, :, 0, 0].astype(jnp.bfloat16),           # (Cexp, Cin)
        "s2": s2, "b2": b2,                                              # (Cexp, 1)
        "w_dw": jnp.transpose(rp["w_dw"][:, 0], (1, 2, 0))
                .reshape(9, Cexp)[:, :, None],                           # (9, Cexp, 1)
        "w_se1": rp["w_se1"][:, :, 0, 0].T,                              # (Cexp, Cse)
        "b_se1": rp["b_se1"].reshape(1, -1),                             # (1, Cse)
        "w_se2": rp["w_se2"][:, :, 0, 0],                                # (Cexp, Cse)
        "b_se2": rp["b_se2"].reshape(-1, 1),                             # (Cexp, 1)
        "s3": s3, "b3": b3,                                              # (Cexp, 1)
        "w_pw": rp["w_pw"][:, :, 0, 0].astype(jnp.bfloat16),             # (Cout, Cexp)
        "w_sc": jnp.transpose(rp["w_sc"], (2, 3, 0, 1)).reshape(9, Cout, Cin)
                .astype(jnp.bfloat16),                                   # (9, Cout, Cin)
    }

    x = jax.random.normal(ks[11], (B, Cin, H, W), jnp.float32)

    y_kernel = mbconv_pallas(x, kp, H, W)
    jax.block_until_ready(y_kernel)

    y_ref = mbconv_reference(x, rp)
    # bf16-operand MXU matmuls vs f32-HIGHEST reference -> slightly looser tolerance.
    np.testing.assert_allclose(np.asarray(y_kernel), np.asarray(y_ref),
                               rtol=2e-2, atol=3e-2)
    print("KERNEL_OK")
</pallas_src>

<mosaic_0001>
module attributes {stable_mosaic.version = 11 : i64} {
  func.func @mbconv_kernel(%arg0: i32, %arg1: memref<1x4x256xf32, #tpu.memory_space<vmem>>, %arg2: memref<4x1xf32, #tpu.memory_space<vmem>>, %arg3: memref<4x1xf32, #tpu.memory_space<vmem>>, %arg4: memref<16x4xbf16, #tpu.memory_space<vmem>>, %arg5: memref<16x1xf32, #tpu.memory_space<vmem>>, %arg6: memref<16x1xf32, #tpu.memory_space<vmem>>, %arg7: memref<9x16x1xf32, #tpu.memory_space<vmem>>, %arg8: memref<16x4xf32, #tpu.memory_space<vmem>>, %arg9: memref<1x4xf32, #tpu.memory_space<vmem>>, %arg10: memref<16x4xf32, #tpu.memory_space<vmem>>, %arg11: memref<16x1xf32, #tpu.memory_space<vmem>>, %arg12: memref<16x1xf32, #tpu.memory_space<vmem>>, %arg13: memref<16x1xf32, #tpu.memory_space<vmem>>, %arg14: memref<8x16xbf16, #tpu.memory_space<vmem>>, %arg15: memref<9x8x4xbf16, #tpu.memory_space<vmem>>, %arg16: memref<1x8x256xf32, #tpu.memory_space<vmem>>) attributes {dimension_semantics = [#tpu.dimension_semantics<parallel>], iteration_bounds = array<i64: 2>, scalar_prefetch = 0 : i64, scratch_operands = 0 : i64, tpu.core_type = #tpu.core_type<tc>, window_params = [{transform_indices = @transform_0, window_bounds = array<i64: 1, 4, 256>}, {pipeline_mode = #tpu.pipeline_mode<synchronous>, transform_indices = @transform_1, window_bounds = array<i64: 4, 1>}, {pipeline_mode = #tpu.pipeline_mode<synchronous>, transform_indices = @transform_2, window_bounds = array<i64: 4, 1>}, {pipeline_mode = #tpu.pipeline_mode<synchronous>, transform_indices = @transform_3, window_bounds = array<i64: 16, 4>}, {pipeline_mode = #tpu.pipeline_mode<synchronous>, transform_indices = @transform_4, window_bounds = array<i64: 16, 1>}, {pipeline_mode = #tpu.pipeline_mode<synchronous>, transform_indices = @transform_5, window_bounds = array<i64: 16, 1>}, {pipeline_mode = #tpu.pipeline_mode<synchronous>, transform_indices = @transform_6, window_bounds = array<i64: 9, 16, 1>}, {pipeline_mode = #tpu.pipeline_mode<synchronous>, transform_indices = @transform_7, window_bounds = array<i64: 16, 4>}, {pipeline_mode = #tpu.pipeline_mode<synchronous>, transform_indices = @transform_8, window_bounds = array<i64: 1, 4>}, {pipeline_mode = #tpu.pipeline_mode<synchronous>, transform_indices = @transform_9, window_bounds = array<i64: 16, 4>}, {pipeline_mode = #tpu.pipeline_mode<synchronous>, transform_indices = @transform_10, window_bounds = array<i64: 16, 1>}, {pipeline_mode = #tpu.pipeline_mode<synchronous>, transform_indices = @transform_11, window_bounds = array<i64: 16, 1>}, {pipeline_mode = #tpu.pipeline_mode<synchronous>, transform_indices = @transform_12, window_bounds = array<i64: 16, 1>}, {pipeline_mode = #tpu.pipeline_mode<synchronous>, transform_indices = @transform_13, window_bounds = array<i64: 8, 16>}, {pipeline_mode = #tpu.pipeline_mode<synchronous>, transform_indices = @transform_14, window_bounds = array<i64: 9, 8, 4>}, {transform_indices = @transform_15, window_bounds = array<i64: 1, 8, 256>}]} {
    %0 = tpu.iota {dimensions = array<i32: 1>} : vector<1x256xi32>
    %c16_i32 = arith.constant 16 : i32
    %c0_i32 = arith.constant 0 : i32
    %1 = arith.cmpi eq, %c16_i32, %c0_i32 : i32
    %c1_i32 = arith.constant 1 : i32
    %2 = arith.select %1, %c1_i32, %c16_i32 : i32
    %3 = vector.broadcast %2 : i32 to vector<1x256xi32>
    %4 = arith.remsi %0, %3 : vector<1x256xi32>
    %c0_i32_0 = arith.constant 0 : i32
    %5 = vector.broadcast %c0_i32_0 : i32 to vector<1x256xi32>
    %6 = arith.cmpi ne, %4, %5 : vector<1x256xi32>
    %c0_i32_1 = arith.constant 0 : i32
    %7 = vector.broadcast %c0_i32_1 : i32 to vector<1x256xi32>
    %8 = arith.cmpi slt, %4, %7 : vector<1x256xi32>
    %c0_i32_2 = arith.constant 0 : i32
    %9 = arith.cmpi slt, %2, %c0_i32_2 : i32
    %10 = vector.broadcast %9 : i1 to vector<1x256xi1>
    %11 = vector.broadcast %10 : vector<1x256xi1> to vector<1x256xi1>
    %12 = arith.xori %8, %11 : vector<1x256xi1>
    %13 = arith.andi %12, %6 : vector<1x256xi1>
    %14 = vector.broadcast %2 : i32 to vector<1x256xi32>
    %15 = arith.addi %4, %14 : vector<1x256xi32>
    %16 = arith.select %13, %15, %4 : vector<1x256xi1>, vector<1x256xi32>
    %c16_i32_3 = arith.constant 16 : i32
    %17 = vector.broadcast %c16_i32_3 : i32 to vector<1x256xi32>
    %18 = arith.cmpi sge, %0, %17 : vector<1x256xi32>
    %c240_i32 = arith.constant 240 : i32
    %19 = vector.broadcast %c240_i32 : i32 to vector<1x256xi32>
    %20 = arith.cmpi slt, %0, %19 : vector<1x256xi32>
    %c1_i32_4 = arith.constant 1 : i32
    %21 = vector.broadcast %c1_i32_4 : i32 to vector<1x256xi32>
    %22 = arith.cmpi sge, %16, %21 : vector<1x256xi32>
    %c14_i32 = arith.constant 14 : i32
    %23 = vector.broadcast %c14_i32 : i32 to vector<1x256xi32>
    %24 = arith.cmpi sle, %16, %23 : vector<1x256xi32>
    %25 = arith.andi %18, %22 : vector<1x256xi1>
    %26 = arith.andi %18, %24 : vector<1x256xi1>
    %27 = arith.andi %20, %22 : vector<1x256xi1>
    %28 = arith.andi %20, %24 : vector<1x256xi1>
    %c0 = arith.constant 0 : index
    %c0_5 = arith.constant 0 : index
    %c0_6 = arith.constant 0 : index
    %29 = vector.load %arg1[%c0, %c0_5, %c0_6] : memref<1x4x256xf32, #tpu.memory_space<vmem>>, vector<1x4x256xf32>
    %30 = vector.shape_cast %29 : vector<1x4x256xf32> to vector<4x256xf32>
    %c0_7 = arith.constant 0 : index
    %c0_8 = arith.constant 0 : index
    %31 = vector.load %arg2[%c0_7, %c0_8] : memref<4x1xf32, #tpu.memory_space<vmem>>, vector<4x1xf32>
    %32 = vector.broadcast %31 : vector<4x1xf32> to vector<4x256xf32>
    %33 = arith.mulf %30, %32 : vector<4x256xf32>
    %c0_9 = arith.constant 0 : index
    %c0_10 = arith.constant 0 : index
    %34 = vector.load %arg3[%c0_9, %c0_10] : memref<4x1xf32, #tpu.memory_space<vmem>>, vector<4x1xf32>
    %35 = vector.broadcast %34 : vector<4x1xf32> to vector<4x256xf32>
    %36 = arith.addf %33, %35 : vector<4x256xf32>
    %cst = arith.constant 0.000000e+00 : f32
    %37 = vector.broadcast %cst : f32 to vector<4x256xf32>
    %38 = arith.maximumf %36, %37 : vector<4x256xf32>
    %c0_11 = arith.constant 0 : index
    %c0_12 = arith.constant 0 : index
    %39 = vector.load %arg4[%c0_11, %c0_12] : memref<16x4xbf16, #tpu.memory_space<vmem>>, vector<16x4xbf16>
    %40 = arith.truncf %38 : vector<4x256xf32> to vector<4x256xbf16>
    %cst_13 = arith.constant dense<0.000000e+00> : vector<16x256xf32>
    %41 = tpu.matmul %39, %40, %cst_13 {dimension_numbers = #tpu.dot_dimension_numbers<[1], [0], [0], [1], [0, 0, 1, 1], [], []>} : vector<16x4xbf16>, vector<4x256xbf16>, vector<16x256xf32> -> vector<16x256xf32>
    %c0_14 = arith.constant 0 : index
    %c0_15 = arith.constant 0 : index
    %42 = vector.load %arg5[%c0_14, %c0_15] : memref<16x1xf32, #tpu.memory_space<vmem>>, vector<16x1xf32>
    %43 = vector.broadcast %42 : vector<16x1xf32> to vector<16x256xf32>
    %44 = arith.mulf %41, %43 : vector<16x256xf32>
    %c0_16 = arith.constant 0 : index
    %c0_17 = arith.constant 0 : index
    %45 = vector.load %arg6[%c0_16, %c0_17] : memref<16x1xf32, #tpu.memory_space<vmem>>, vector<16x1xf32>
    %46 = vector.broadcast %45 : vector<16x1xf32> to vector<16x256xf32>
    %47 = arith.addf %44, %46 : vector<16x256xf32>
    %cst_18 = arith.constant 0.000000e+00 : f32
    %48 = vector.broadcast %cst_18 : f32 to vector<16x256xf32>
    %49 = arith.maximumf %47, %48 : vector<16x256xf32>
    %cst_19 = arith.constant 0.000000e+00 : f32
    %50 = vector.broadcast %cst_19 : f32 to vector<16x256xf32>
    %cst_20 = arith.constant 0.000000e+00 : f32
    %51 = vector.broadcast %cst_20 : f32 to vector<8x256xf32>
    %c17_i32 = arith.constant 17 : i32
    %52 = tpu.dynamic_rotate %49 by %c17_i32 dim 1 : vector<16x256xf32>, i32 -> vector<16x256xf32>
    %c17_i32_21 = arith.constant 17 : i32
    %53 = tpu.dynamic_rotate %30 by %c17_i32_21 dim 1 : vector<4x256xf32>, i32 -> vector<4x256xf32>
    %cst_22 = arith.constant 0.000000e+00 : f32
    %54 = vector.shape_cast %25 : vector<1x256xi1> to vector<1x256xi1>
    %55 = vector.broadcast %54 : vector<1x256xi1> to vector<16x256xi1>
    %56 = vector.broadcast %cst_22 : f32 to vector<16x256xf32>
    %57 = arith.select %55, %52, %56 : vector<16x256xi1>, vector<16x256xf32>
    %cst_23 = arith.constant 0.000000e+00 : f32
    %58 = vector.shape_cast %25 : vector<1x256xi1> to vector<1x256xi1>
    %59 = vector.broadcast %58 : vector<1x256xi1> to vector<4x256xi1>
    %60 = vector.broadcast %cst_23 : f32 to vector<4x256xf32>
    %61 = arith.select %59, %53, %60 : vector<4x256xi1>, vector<4x256xf32>
    %c0_24 = arith.constant 0 : index
    %c0_25 = arith.constant 0 : index
    %c0_26 = arith.constant 0 : index
    %62 = vector.load %arg7[%c0_24, %c0_25, %c0_26] : memref<9x16x1xf32, #tpu.memory_space<vmem>>, vector<1x16x1xf32>
    %63 = vector.shape_cast %62 : vector<1x16x1xf32> to vector<16x1xf32>
    %64 = vector.broadcast %63 : vector<16x1xf32> to vector<16x256xf32>
    %65 = arith.mulf %57, %64 : vector<16x256xf32>
    %66 = arith.addf %50, %65 : vector<16x256xf32>
    %c0_27 = arith.constant 0 : index
    %c0_28 = arith.constant 0 : index
    %c0_29 = arith.constant 0 : index
    %67 = vector.load %arg15[%c0_27, %c0_28, %c0_29] : memref<9x8x4xbf16, #tpu.memory_space<vmem>>, vector<1x8x4xbf16>
    %68 = vector.shape_cast %67 : vector<1x8x4xbf16> to vector<8x4xbf16>
    %69 = arith.truncf %61 : vector<4x256xf32> to vector<4x256xbf16>
    %cst_30 = arith.constant dense<0.000000e+00> : vector<8x256xf32>
    %70 = tpu.matmul %68, %69, %cst_30 {dimension_numbers = #tpu.dot_dimension_numbers<[1], [0], [0], [1], [0, 0, 1, 1], [], []>} : vector<8x4xbf16>, vector<4x256xbf16>, vector<8x256xf32> -> vector<8x256xf32>
    %71 = arith.addf %51, %70 : vector<8x256xf32>
    %c16_i32_31 = arith.constant 16 : i32
    %72 = tpu.dynamic_rotate %49 by %c16_i32_31 dim 1 : vector<16x256xf32>, i32 -> vector<16x256xf32>
    %c16_i32_32 = arith.constant 16 : i32
    %73 = tpu.dynamic_rotate %30 by %c16_i32_32 dim 1 : vector<4x256xf32>, i32 -> vector<4x256xf32>
    %cst_33 = arith.constant 0.000000e+00 : f32
    %74 = vector.shape_cast %18 : vector<1x256xi1> to vector<1x256xi1>
    %75 = vector.broadcast %74 : vector<1x256xi1> to vector<16x256xi1>
    %76 = vector.broadcast %cst_33 : f32 to vector<16x256xf32>
    %77 = arith.select %75, %72, %76 : vector<16x256xi1>, vector<16x256xf32>
    %cst_34 = arith.constant 0.000000e+00 : f32
    %78 = vector.shape_cast %18 : vector<1x256xi1> to vector<1x256xi1>
    %79 = vector.broadcast %78 : vector<1x256xi1> to vector<4x256xi1>
    %80 = vector.broadcast %cst_34 : f32 to vector<4x256xf32>
    %81 = arith.select %79, %73, %80 : vector<4x256xi1>, vector<4x256xf32>
    %c1 = arith.constant 1 : index
    %c0_35 = arith.constant 0 : index
    %c0_36 = arith.constant 0 : index
    %82 = vector.load %arg7[%c1, %c0_35, %c0_36] : memref<9x16x1xf32, #tpu.memory_space<vmem>>, vector<1x16x1xf32>
    %83 = vector.shape_cast %82 : vector<1x16x1xf32> to vector<16x1xf32>
    %84 = vector.broadcast %83 : vector<16x1xf32> to vector<16x256xf32>
    %85 = arith.mulf %77, %84 : vector<16x256xf32>
    %86 = arith.addf %66, %85 : vector<16x256xf32>
    %c1_37 = arith.constant 1 : index
    %c0_38 = arith.constant 0 : index
    %c0_39 = arith.constant 0 : index
    %87 = vector.load %arg15[%c1_37, %c0_38, %c0_39] : memref<9x8x4xbf16, #tpu.memory_space<vmem>>, vector<1x8x4xbf16>
    %88 = vector.shape_cast %87 : vector<1x8x4xbf16> to vector<8x4xbf16>
    %89 = arith.truncf %81 : vector<4x256xf32> to vector<4x256xbf16>
    %cst_40 = arith.constant dense<0.000000e+00> : vector<8x256xf32>
    %90 = tpu.matmul %88, %89, %cst_40 {dimension_numbers = #tpu.dot_dimension_numbers<[1], [0], [0], [1], [0, 0, 1, 1], [], []>} : vector<8x4xbf16>, vector<4x256xbf16>, vector<8x256xf32> -> vector<8x256xf32>
    %91 = arith.addf %71, %90 : vector<8x256xf32>
    %c15_i32 = arith.constant 15 : i32
    %92 = tpu.dynamic_rotate %49 by %c15_i32 dim 1 : vector<16x256xf32>, i32 -> vector<16x256xf32>
    %c15_i32_41 = arith.constant 15 : i32
    %93 = tpu.dynamic_rotate %30 by %c15_i32_41 dim 1 : vector<4x256xf32>, i32 -> vector<4x256xf32>
    %cst_42 = arith.constant 0.000000e+00 : f32
    %94 = vector.shape_cast %26 : vector<1x256xi1> to vector<1x256xi1>
    %95 = vector.broadcast %94 : vector<1x256xi1> to vector<16x256xi1>
    %96 = vector.broadcast %cst_42 : f32 to vector<16x256xf32>
    %97 = arith.select %95, %92, %96 : vector<16x256xi1>, vector<16x256xf32>
    %cst_43 = arith.constant 0.000000e+00 : f32
    %98 = vector.shape_cast %26 : vector<1x256xi1> to vector<1x256xi1>
    %99 = vector.broadcast %98 : vector<1x256xi1> to vector<4x256xi1>
    %100 = vector.broadcast %cst_43 : f32 to vector<4x256xf32>
    %101 = arith.select %99, %93, %100 : vector<4x256xi1>, vector<4x256xf32>
    %c2 = arith.constant 2 : index
    %c0_44 = arith.constant 0 : index
    %c0_45 = arith.constant 0 : index
    %102 = vector.load %arg7[%c2, %c0_44, %c0_45] : memref<9x16x1xf32, #tpu.memory_space<vmem>>, vector<1x16x1xf32>
    %103 = vector.shape_cast %102 : vector<1x16x1xf32> to vector<16x1xf32>
    %104 = vector.broadcast %103 : vector<16x1xf32> to vector<16x256xf32>
    %105 = arith.mulf %97, %104 : vector<16x256xf32>
    %106 = arith.addf %86, %105 : vector<16x256xf32>
    %c2_46 = arith.constant 2 : index
    %c0_47 = arith.constant 0 : index
    %c0_48 = arith.constant 0 : index
    %107 = vector.load %arg15[%c2_46, %c0_47, %c0_48] : memref<9x8x4xbf16, #tpu.memory_space<vmem>>, vector<1x8x4xbf16>
    %108 = vector.shape_cast %107 : vector<1x8x4xbf16> to vector<8x4xbf16>
    %109 = arith.truncf %101 : vector<4x256xf32> to vector<4x256xbf16>
    %cst_49 = arith.constant dense<0.000000e+00> : vector<8x256xf32>
    %110 = tpu.matmul %108, %109, %cst_49 {dimension_numbers = #tpu.dot_dimension_numbers<[1], [0], [0], [1], [0, 0, 1, 1], [], []>} : vector<8x4xbf16>, vector<4x256xbf16>, vector<8x256xf32> -> vector<8x256xf32>
    %111 = arith.addf %91, %110 : vector<8x256xf32>
    %c1_i32_50 = arith.constant 1 : i32
    %112 = tpu.dynamic_rotate %49 by %c1_i32_50 dim 1 : vector<16x256xf32>, i32 -> vector<16x256xf32>
    %c1_i32_51 = arith.constant 1 : i32
    %113 = tpu.dynamic_rotate %30 by %c1_i32_51 dim 1 : vector<4x256xf32>, i32 -> vector<4x256xf32>
    %cst_52 = arith.constant 0.000000e+00 : f32
    %114 = vector.shape_cast %22 : vector<1x256xi1> to vector<1x256xi1>
    %115 = vector.broadcast %114 : vector<1x256xi1> to vector<16x256xi1>
    %116 = vector.broadcast %cst_52 : f32 to vector<16x256xf32>
    %117 = arith.select %115, %112, %116 : vector<16x256xi1>, vector<16x256xf32>
    %cst_53 = arith.constant 0.000000e+00 : f32
    %118 = vector.shape_cast %22 : vector<1x256xi1> to vector<1x256xi1>
    %119 = vector.broadcast %118 : vector<1x256xi1> to vector<4x256xi1>
    %120 = vector.broadcast %cst_53 : f32 to vector<4x256xf32>
    %121 = arith.select %119, %113, %120 : vector<4x256xi1>, vector<4x256xf32>
    %c3 = arith.constant 3 : index
    %c0_54 = arith.constant 0 : index
    %c0_55 = arith.constant 0 : index
    %122 = vector.load %arg7[%c3, %c0_54, %c0_55] : memref<9x16x1xf32, #tpu.memory_space<vmem>>, vector<1x16x1xf32>
    %123 = vector.shape_cast %122 : vector<1x16x1xf32> to vector<16x1xf32>
    %124 = vector.broadcast %123 : vector<16x1xf32> to vector<16x256xf32>
    %125 = arith.mulf %117, %124 : vector<16x256xf32>
    %126 = arith.addf %106, %125 : vector<16x256xf32>
    %c3_56 = arith.constant 3 : index
    %c0_57 = arith.constant 0 : index
    %c0_58 = arith.constant 0 : index
    %127 = vector.load %arg15[%c3_56, %c0_57, %c0_58] : memref<9x8x4xbf16, #tpu.memory_space<vmem>>, vector<1x8x4xbf16>
    %128 = vector.shape_cast %127 : vector<1x8x4xbf16> to vector<8x4xbf16>
    %129 = arith.truncf %121 : vector<4x256xf32> to vector<4x256xbf16>
    %cst_59 = arith.constant dense<0.000000e+00> : vector<8x256xf32>
    %130 = tpu.matmul %128, %129, %cst_59 {dimension_numbers = #tpu.dot_dimension_numbers<[1], [0], [0], [1], [0, 0, 1, 1], [], []>} : vector<8x4xbf16>, vector<4x256xbf16>, vector<8x256xf32> -> vector<8x256xf32>
    %131 = arith.addf %111, %130 : vector<8x256xf32>
    %c4 = arith.constant 4 : index
    %c0_60 = arith.constant 0 : index
    %c0_61 = arith.constant 0 : index
    %132 = vector.load %arg7[%c4, %c0_60, %c0_61] : memref<9x16x1xf32, #tpu.memory_space<vmem>>, vector<1x16x1xf32>
    %133 = vector.shape_cast %132 : vector<1x16x1xf32> to vector<16x1xf32>
    %134 = vector.broadcast %133 : vector<16x1xf32> to vector<16x256xf32>
    %135 = arith.mulf %49, %134 : vector<16x256xf32>
    %136 = arith.addf %126, %135 : vector<16x256xf32>
    %c4_62 = arith.constant 4 : index
    %c0_63 = arith.constant 0 : index
    %c0_64 = arith.constant 0 : index
    %137 = vector.load %arg15[%c4_62, %c0_63, %c0_64] : memref<9x8x4xbf16, #tpu.memory_space<vmem>>, vector<1x8x4xbf16>
    %138 = vector.shape_cast %137 : vector<1x8x4xbf16> to vector<8x4xbf16>
    %139 = arith.truncf %30 : vector<4x256xf32> to vector<4x256xbf16>
    %cst_65 = arith.constant dense<0.000000e+00> : vector<8x256xf32>
    %140 = tpu.matmul %138, %139, %cst_65 {dimension_numbers = #tpu.dot_dimension_numbers<[1], [0], [0], [1], [0, 0, 1, 1], [], []>} : vector<8x4xbf16>, vector<4x256xbf16>, vector<8x256xf32> -> vector<8x256xf32>
    %141 = arith.addf %131, %140 : vector<8x256xf32>
    %c255_i32 = arith.constant 255 : i32
    %142 = tpu.dynamic_rotate %49 by %c255_i32 dim 1 : vector<16x256xf32>, i32 -> vector<16x256xf32>
    %c255_i32_66 = arith.constant 255 : i32
    %143 = tpu.dynamic_rotate %30 by %c255_i32_66 dim 1 : vector<4x256xf32>, i32 -> vector<4x256xf32>
    %cst_67 = arith.constant 0.000000e+00 : f32
    %144 = vector.shape_cast %24 : vector<1x256xi1> to vector<1x256xi1>
    %145 = vector.broadcast %144 : vector<1x256xi1> to vector<16x256xi1>
    %146 = vector.broadcast %cst_67 : f32 to vector<16x256xf32>
    %147 = arith.select %145, %142, %146 : vector<16x256xi1>, vector<16x256xf32>
    %cst_68 = arith.constant 0.000000e+00 : f32
    %148 = vector.shape_cast %24 : vector<1x256xi1> to vector<1x256xi1>
    %149 = vector.broadcast %148 : vector<1x256xi1> to vector<4x256xi1>
    %150 = vector.broadcast %cst_68 : f32 to vector<4x256xf32>
    %151 = arith.select %149, %143, %150 : vector<4x256xi1>, vector<4x256xf32>
    %c5 = arith.constant 5 : index
    %c0_69 = arith.constant 0 : index
    %c0_70 = arith.constant 0 : index
    %152 = vector.load %arg7[%c5, %c0_69, %c0_70] : memref<9x16x1xf32, #tpu.memory_space<vmem>>, vector<1x16x1xf32>
    %153 = vector.shape_cast %152 : vector<1x16x1xf32> to vector<16x1xf32>
    %154 = vector.broadcast %153 : vector<16x1xf32> to vector<16x256xf32>
    %155 = arith.mulf %147, %154 : vector<16x256xf32>
    %156 = arith.addf %136, %155 : vector<16x256xf32>
    %c5_71 = arith.constant 5 : index
    %c0_72 = arith.constant 0 : index
    %c0_73 = arith.constant 0 : index
    %157 = vector.load %arg15[%c5_71, %c0_72, %c0_73] : memref<9x8x4xbf16, #tpu.memory_space<vmem>>, vector<1x8x4xbf16>
    %158 = vector.shape_cast %157 : vector<1x8x4xbf16> to vector<8x4xbf16>
    %159 = arith.truncf %151 : vector<4x256xf32> to vector<4x256xbf16>
    %cst_74 = arith.constant dense<0.000000e+00> : vector<8x256xf32>
    %160 = tpu.matmul %158, %159, %cst_74 {dimension_numbers = #tpu.dot_dimension_numbers<[1], [0], [0], [1], [0, 0, 1, 1], [], []>} : vector<8x4xbf16>, vector<4x256xbf16>, vector<8x256xf32> -> vector<8x256xf32>
    %161 = arith.addf %141, %160 : vector<8x256xf32>
    %c241_i32 = arith.constant 241 : i32
    %162 = tpu.dynamic_rotate %49 by %c241_i32 dim 1 : vector<16x256xf32>, i32 -> vector<16x256xf32>
    %c241_i32_75 = arith.constant 241 : i32
    %163 = tpu.dynamic_rotate %30 by %c241_i32_75 dim 1 : vector<4x256xf32>, i32 -> vector<4x256xf32>
    %cst_76 = arith.constant 0.000000e+00 : f32
    %164 = vector.shape_cast %27 : vector<1x256xi1> to vector<1x256xi1>
    %165 = vector.broadcast %164 : vector<1x256xi1> to vector<16x256xi1>
    %166 = vector.broadcast %cst_76 : f32 to vector<16x256xf32>
    %167 = arith.select %165, %162, %166 : vector<16x256xi1>, vector<16x256xf32>
    %cst_77 = arith.constant 0.000000e+00 : f32
    %168 = vector.shape_cast %27 : vector<1x256xi1> to vector<1x256xi1>
    %169 = vector.broadcast %168 : vector<1x256xi1> to vector<4x256xi1>
    %170 = vector.broadcast %cst_77 : f32 to vector<4x256xf32>
    %171 = arith.select %169, %163, %170 : vector<4x256xi1>, vector<4x256xf32>
    %c6 = arith.constant 6 : index
    %c0_78 = arith.constant 0 : index
    %c0_79 = arith.constant 0 : index
    %172 = vector.load %arg7[%c6, %c0_78, %c0_79] : memref<9x16x1xf32, #tpu.memory_space<vmem>>, vector<1x16x1xf32>
    %173 = vector.shape_cast %172 : vector<1x16x1xf32> to vector<16x1xf32>
    %174 = vector.broadcast %173 : vector<16x1xf32> to vector<16x256xf32>
    %175 = arith.mulf %167, %174 : vector<16x256xf32>
    %176 = arith.addf %156, %175 : vector<16x256xf32>
    %c6_80 = arith.constant 6 : index
    %c0_81 = arith.constant 0 : index
    %c0_82 = arith.constant 0 : index
    %177 = vector.load %arg15[%c6_80, %c0_81, %c0_82] : memref<9x8x4xbf16, #tpu.memory_space<vmem>>, vector<1x8x4xbf16>
    %178 = vector.shape_cast %177 : vector<1x8x4xbf16> to vector<8x4xbf16>
    %179 = arith.truncf %171 : vector<4x256xf32> to vector<4x256xbf16>
    %cst_83 = arith.constant dense<0.000000e+00> : vector<8x256xf32>
    %180 = tpu.matmul %178, %179, %cst_83 {dimension_numbers = #tpu.dot_dimension_numbers<[1], [0], [0], [1], [0, 0, 1, 1], [], []>} : vector<8x4xbf16>, vector<4x256xbf16>, vector<8x256xf32> -> vector<8x256xf32>
    %181 = arith.addf %161, %180 : vector<8x256xf32>
    %c240_i32_84 = arith.constant 240 : i32
    %182 = tpu.dynamic_rotate %49 by %c240_i32_84 dim 1 : vector<16x256xf32>, i32 -> vector<16x256xf32>
    %c240_i32_85 = arith.constant 240 : i32
    %183 = tpu.dynamic_rotate %30 by %c240_i32_85 dim 1 : vector<4x256xf32>, i32 -> vector<4x256xf32>
    %cst_86 = arith.constant 0.000000e+00 : f32
    %184 = vector.shape_cast %20 : vector<1x256xi1> to vector<1x256xi1>
    %185 = vector.broadcast %184 : vector<1x256xi1> to vector<16x256xi1>
    %186 = vector.broadcast %cst_86 : f32 to vector<16x256xf32>
    %187 = arith.select %185, %182, %186 : vector<16x256xi1>, vector<16x256xf32>
    %cst_87 = arith.constant 0.000000e+00 : f32
    %188 = vector.shape_cast %20 : vector<1x256xi1> to vector<1x256xi1>
    %189 = vector.broadcast %188 : vector<1x256xi1> to vector<4x256xi1>
    %190 = vector.broadcast %cst_87 : f32 to vector<4x256xf32>
    %191 = arith.select %189, %183, %190 : vector<4x256xi1>, vector<4x256xf32>
    %c7 = arith.constant 7 : index
    %c0_88 = arith.constant 0 : index
    %c0_89 = arith.constant 0 : index
    %192 = vector.load %arg7[%c7, %c0_88, %c0_89] : memref<9x16x1xf32, #tpu.memory_space<vmem>>, vector<1x16x1xf32>
    %193 = vector.shape_cast %192 : vector<1x16x1xf32> to vector<16x1xf32>
    %194 = vector.broadcast %193 : vector<16x1xf32> to vector<16x256xf32>
    %195 = arith.mulf %187, %194 : vector<16x256xf32>
    %196 = arith.addf %176, %195 : vector<16x256xf32>
    %c7_90 = arith.constant 7 : index
    %c0_91 = arith.constant 0 : index
    %c0_92 = arith.constant 0 : index
    %197 = vector.load %arg15[%c7_90, %c0_91, %c0_92] : memref<9x8x4xbf16, #tpu.memory_space<vmem>>, vector<1x8x4xbf16>
    %198 = vector.shape_cast %197 : vector<1x8x4xbf16> to vector<8x4xbf16>
    %199 = arith.truncf %191 : vector<4x256xf32> to vector<4x256xbf16>
    %cst_93 = arith.constant dense<0.000000e+00> : vector<8x256xf32>
    %200 = tpu.matmul %198, %199, %cst_93 {dimension_numbers = #tpu.dot_dimension_numbers<[1], [0], [0], [1], [0, 0, 1, 1], [], []>} : vector<8x4xbf16>, vector<4x256xbf16>, vector<8x256xf32> -> vector<8x256xf32>
    %201 = arith.addf %181, %200 : vector<8x256xf32>
    %c239_i32 = arith.constant 239 : i32
    %202 = tpu.dynamic_rotate %49 by %c239_i32 dim 1 : vector<16x256xf32>, i32 -> vector<16x256xf32>
    %c239_i32_94 = arith.constant 239 : i32
    %203 = tpu.dynamic_rotate %30 by %c239_i32_94 dim 1 : vector<4x256xf32>, i32 -> vector<4x256xf32>
    %cst_95 = arith.constant 0.000000e+00 : f32
    %204 = vector.shape_cast %28 : vector<1x256xi1> to vector<1x256xi1>
    %205 = vector.broadcast %204 : vector<1x256xi1> to vector<16x256xi1>
    %206 = vector.broadcast %cst_95 : f32 to vector<16x256xf32>
    %207 = arith.select %205, %202, %206 : vector<16x256xi1>, vector<16x256xf32>
    %cst_96 = arith.constant 0.000000e+00 : f32
    %208 = vector.shape_cast %28 : vector<1x256xi1> to vector<1x256xi1>
    %209 = vector.broadcast %208 : vector<1x256xi1> to vector<4x256xi1>
    %210 = vector.broadcast %cst_96 : f32 to vector<4x256xf32>
    %211 = arith.select %209, %203, %210 : vector<4x256xi1>, vector<4x256xf32>
    %c8 = arith.constant 8 : index
    %c0_97 = arith.constant 0 : index
    %c0_98 = arith.constant 0 : index
    %212 = vector.load %arg7[%c8, %c0_97, %c0_98] : memref<9x16x1xf32, #tpu.memory_space<vmem>>, vector<1x16x1xf32>
    %213 = vector.shape_cast %212 : vector<1x16x1xf32> to vector<16x1xf32>
    %214 = vector.broadcast %213 : vector<16x1xf32> to vector<16x256xf32>
    %215 = arith.mulf %207, %214 : vector<16x256xf32>
    %216 = arith.addf %196, %215 : vector<16x256xf32>
    %c8_99 = arith.constant 8 : index
    %c0_100 = arith.constant 0 : index
    %c0_101 = arith.constant 0 : index
    %217 = vector.load %arg15[%c8_99, %c0_100, %c0_101] : memref<9x8x4xbf16, #tpu.memory_space<vmem>>, vector<1x8x4xbf16>
    %218 = vector.shape_cast %217 : vector<1x8x4xbf16> to vector<8x4xbf16>
    %219 = arith.truncf %211 : vector<4x256xf32> to vector<4x256xbf16>
    %cst_102 = arith.constant dense<0.000000e+00> : vector<8x256xf32>
    %220 = tpu.matmul %218, %219, %cst_102 {dimension_numbers = #tpu.dot_dimension_numbers<[1], [0], [0], [1], [0, 0, 1, 1], [], []>} : vector<8x4xbf16>, vector<4x256xbf16>, vector<8x256xf32> -> vector<8x256xf32>
    %221 = arith.addf %201, %220 : vector<8x256xf32>
    %cst_103 = arith.constant dense<0.000000e+00> : vector<16xf32>
    %222 = vector.multi_reduction <add>, %216, %cst_103 [1] : vector<16x256xf32> to vector<16xf32>
    %223 = vector.shape_cast %222 : vector<16xf32> to vector<16x1xf32>
    %cst_104 = arith.constant 2.560000e+02 : f32
    %224 = vector.broadcast %cst_104 : f32 to vector<16x1xf32>
    %225 = arith.divf %223, %224 : vector<16x1xf32>
    %c0_105 = arith.constant 0 : index
    %c0_106 = arith.constant 0 : index
    %226 = vector.load %arg8[%c0_105, %c0_106] : memref<16x4xf32, #tpu.memory_space<vmem>>, vector<16x4xf32>
    %227 = vector.broadcast %225 : vector<16x1xf32> to vector<16x4xf32>
    %228 = arith.mulf %226, %227 : vector<16x4xf32>
    %cst_107 = arith.constant dense<0.000000e+00> : vector<4xf32>
    %229 = vector.multi_reduction <add>, %228, %cst_107 [0] : vector<16x4xf32> to vector<4xf32>
    %230 = vector.shape_cast %229 : vector<4xf32> to vector<1x4xf32>
    %c0_108 = arith.constant 0 : index
    %c0_109 = arith.constant 0 : index
    %231 = vector.load %arg9[%c0_108, %c0_109] : memref<1x4xf32, #tpu.memory_space<vmem>>, vector<1x4xf32>
    %232 = arith.addf %230, %231 : vector<1x4xf32>
    %cst_110 = arith.constant 0.000000e+00 : f32
    %233 = vector.broadcast %cst_110 : f32 to vector<1x4xf32>
    %234 = arith.maximumf %232, %233 : vector<1x4xf32>
    %c0_111 = arith.constant 0 : index
    %c0_112 = arith.constant 0 : index
    %235 = vector.load %arg10[%c0_111, %c0_112] : memref<16x4xf32, #tpu.memory_space<vmem>>, vector<16x4xf32>
    %236 = vector.broadcast %234 : vector<1x4xf32> to vector<16x4xf32>
    %237 = arith.mulf %235, %236 : vector<16x4xf32>
    %cst_113 = arith.constant dense<0.000000e+00> : vector<16xf32>
    %238 = vector.multi_reduction <add>, %237, %cst_113 [1] : vector<16x4xf32> to vector<16xf32>
    %239 = vector.shape_cast %238 : vector<16xf32> to vector<16x1xf32>
    %c0_114 = arith.constant 0 : index
    %c0_115 = arith.constant 0 : index
    %240 = vector.load %arg11[%c0_114, %c0_115] : memref<16x1xf32, #tpu.memory_space<vmem>>, vector<16x1xf32>
    %241 = arith.addf %239, %240 : vector<16x1xf32>
    %242 = arith.negf %241 : vector<16x1xf32>
    %243 = math.exp %242 : vector<16x1xf32>
    %cst_116 = arith.constant 1.000000e+00 : f32
    %244 = vector.broadcast %cst_116 : f32 to vector<16x1xf32>
    %245 = arith.addf %244, %243 : vector<16x1xf32>
    %246 = arith.divf %244, %245 : vector<16x1xf32>
    %247 = vector.broadcast %246 : vector<16x1xf32> to vector<16x256xf32>
    %248 = arith.mulf %216, %247 : vector<16x256xf32>
    %c0_117 = arith.constant 0 : index
    %c0_118 = arith.constant 0 : index
    %249 = vector.load %arg12[%c0_117, %c0_118] : memref<16x1xf32, #tpu.memory_space<vmem>>, vector<16x1xf32>
    %250 = vector.broadcast %249 : vector<16x1xf32> to vector<16x256xf32>
    %251 = arith.mulf %248, %250 : vector<16x256xf32>
    %c0_119 = arith.constant 0 : index
    %c0_120 = arith.constant 0 : index
    %252 = vector.load %arg13[%c0_119, %c0_120] : memref<16x1xf32, #tpu.memory_space<vmem>>, vector<16x1xf32>
    %253 = vector.broadcast %252 : vector<16x1xf32> to vector<16x256xf32>
    %254 = arith.addf %251, %253 : vector<16x256xf32>
    %c0_121 = arith.constant 0 : index
    %c0_122 = arith.constant 0 : index
    %255 = vector.load %arg14[%c0_121, %c0_122] : memref<8x16xbf16, #tpu.memory_space<vmem>>, vector<8x16xbf16>
    %256 = arith.truncf %254 : vector<16x256xf32> to vector<16x256xbf16>
    %cst_123 = arith.constant dense<0.000000e+00> : vector<8x256xf32>
    %257 = tpu.matmul %255, %256, %cst_123 {dimension_numbers = #tpu.dot_dimension_numbers<[1], [0], [0], [1], [0, 0, 1, 1], [], []>} : vector<8x16xbf16>, vector<16x256xbf16>, vector<8x256xf32> -> vector<8x256xf32>
    %258 = arith.addf %257, %221 : vector<8x256xf32>
    %c0_124 = arith.constant 0 : index
    %c0_125 = arith.constant 0 : index
    %c0_126 = arith.constant 0 : index
    %259 = vector.load %arg16[%c0_124, %c0_125, %c0_126] : memref<1x8x256xf32, #tpu.memory_space<vmem>>, vector<1x8x256xf32>
    %260 = vector.shape_cast %259 : vector<1x8x256xf32> to vector<8x256xf32>
    %261 = vector.shape_cast %258 : vector<8x256xf32> to vector<1x8x256xf32>
    tpu.vector_store %arg16[%c0_124, %c0_125, %c0_126], %261 {strides = array<i32>} : memref<1x8x256xf32, #tpu.memory_space<vmem>>, vector<1x8x256xf32>,
    return
  }
  func.func @transform_0(%arg0: i32) -> (i32, i32, i32) {
    %c0_i32 = arith.constant 0 : i32
    %c0_i32_0 = arith.constant 0 : i32
    %c0_i32_1 = arith.constant 0 : i32
    return %arg0, %c0_i32, %c0_i32_0 : i32, i32, i32
  }
  func.func @transform_1(%arg0: i32) -> (i32, i32) {
    %c0_i32 = arith.constant 0 : i32
    %c0_i32_0 = arith.constant 0 : i32
    %c0_i32_1 = arith.constant 0 : i32
    return %c0_i32, %c0_i32_0 : i32, i32
  }
  func.func @transform_2(%arg0: i32) -> (i32, i32) {
    %c0_i32 = arith.constant 0 : i32
    %c0_i32_0 = arith.constant 0 : i32
    %c0_i32_1 = arith.constant 0 : i32
    return %c0_i32, %c0_i32_0 : i32, i32
  }
  func.func @transform_3(%arg0: i32) -> (i32, i32) {
    %c0_i32 = arith.constant 0 : i32
    %c0_i32_0 = arith.constant 0 : i32
    %c0_i32_1 = arith.constant 0 : i32
    return %c0_i32, %c0_i32_0 : i32, i32
  }
  func.func @transform_4(%arg0: i32) -> (i32, i32) {
    %c0_i32 = arith.constant 0 : i32
    %c0_i32_0 = arith.constant 0 : i32
    %c0_i32_1 = arith.constant 0 : i32
    return %c0_i32, %c0_i32_0 : i32, i32
  }
  func.func @transform_5(%arg0: i32) -> (i32, i32) {
    %c0_i32 = arith.constant 0 : i32
    %c0_i32_0 = arith.constant 0 : i32
    %c0_i32_1 = arith.constant 0 : i32
    return %c0_i32, %c0_i32_0 : i32, i32
  }
  func.func @transform_6(%arg0: i32) -> (i32, i32, i32) {
    %c0_i32 = arith.constant 0 : i32
    %c0_i32_0 = arith.constant 0 : i32
    %c0_i32_1 = arith.constant 0 : i32
    %c0_i32_2 = arith.constant 0 : i32
    return %c0_i32, %c0_i32_0, %c0_i32_1 : i32, i32, i32
  }
  func.func @transform_7(%arg0: i32) -> (i32, i32) {
    %c0_i32 = arith.constant 0 : i32
    %c0_i32_0 = arith.constant 0 : i32
    %c0_i32_1 = arith.constant 0 : i32
    return %c0_i32, %c0_i32_0 : i32, i32
  }
  func.func @transform_8(%arg0: i32) -> (i32, i32) {
    %c0_i32 = arith.constant 0 : i32
    %c0_i32_0 = arith.constant 0 : i32
    %c0_i32_1 = arith.constant 0 : i32
    return %c0_i32, %c0_i32_0 : i32, i32
  }
  func.func @transform_9(%arg0: i32) -> (i32, i32) {
    %c0_i32 = arith.constant 0 : i32
    %c0_i32_0 = arith.constant 0 : i32
    %c0_i32_1 = arith.constant 0 : i32
    return %c0_i32, %c0_i32_0 : i32, i32
  }
  func.func @transform_10(%arg0: i32) -> (i32, i32) {
    %c0_i32 = arith.constant 0 : i32
    %c0_i32_0 = arith.constant 0 : i32
    %c0_i32_1 = arith.constant 0 : i32
    return %c0_i32, %c0_i32_0 : i32, i32
  }
  func.func @transform_11(%arg0: i32) -> (i32, i32) {
    %c0_i32 = arith.constant 0 : i32
    %c0_i32_0 = arith.constant 0 : i32
    %c0_i32_1 = arith.constant 0 : i32
    return %c0_i32, %c0_i32_0 : i32, i32
  }
  func.func @transform_12(%arg0: i32) -> (i32, i32) {
    %c0_i32 = arith.constant 0 : i32
    %c0_i32_0 = arith.constant 0 : i32
    %c0_i32_1 = arith.constant 0 : i32
    return %c0_i32, %c0_i32_0 : i32, i32
  }
  func.func @transform_13(%arg0: i32) -> (i32, i32) {
    %c0_i32 = arith.constant 0 : i32
    %c0_i32_0 = arith.constant 0 : i32
    %c0_i32_1 = arith.constant 0 : i32
    return %c0_i32, %c0_i32_0 : i32, i32
  }
  func.func @transform_14(%arg0: i32) -> (i32, i32, i32) {
    %c0_i32 = arith.constant 0 : i32
    %c0_i32_0 = arith.constant 0 : i32
    %c0_i32_1 = arith.constant 0 : i32
    %c0_i32_2 = arith.constant 0 : i32
    return %c0_i32, %c0_i32_0, %c0_i32_1 : i32, i32, i32
  }
  func.func @transform_15(%arg0: i32) -> (i32, i32, i32) {
    %c0_i32 = arith.constant 0 : i32
    %c0_i32_0 = arith.constant 0 : i32
    %c0_i32_1 = arith.constant 0 : i32
    return %arg0, %c0_i32, %c0_i32_0 : i32, i32, i32
  }
}

</mosaic_0001>

<llo_original>
// kernel: tpu_custom_call.1
$region0: #{tpu_custom_call.1}
  #allocation0 [shape = 'u32[]', space=smem, size = 0x4, offset = 0x4, fixed_abs, tag = 'smem constant byte address 0x4 - core index']
  #allocation1 [shape = 'u32[144,128]{1,0:T(1,128)}', space=vmem, size = 0x12000, scoped, tag = 'internal scratch']
  %s0 = inlined_call_operand.vmem [shape: f32[2,4,256], index: 0, kind: input, shape index: {}]
  %s1 = inlined_call_operand.vmem [shape: f32[4,1], index: 1, kind: input, shape index: {}]
  %s2 = inlined_call_operand.vmem [shape: f32[4,1], index: 2, kind: input, shape index: {}]
  %s3 = inlined_call_operand.vmem [shape: bf16[16,4], index: 3, kind: input, shape index: {}]
  %s4 = inlined_call_operand.vmem [shape: f32[16,1], index: 4, kind: input, shape index: {}]
  %s5 = inlined_call_operand.vmem [shape: f32[16,1], index: 5, kind: input, shape index: {}]
  %s6 = inlined_call_operand.vmem [shape: f32[9,16,1], index: 6, kind: input, shape index: {}]
  %s7 = inlined_call_operand.vmem [shape: f32[16,4], index: 7, kind: input, shape index: {}]
  %s8 = inlined_call_operand.vmem [shape: f32[1,4], index: 8, kind: input, shape index: {}]
  %s9 = inlined_call_operand.vmem [shape: f32[16,4], index: 9, kind: input, shape index: {}]
  %s10 = inlined_call_operand.vmem [shape: f32[16,1], index: 10, kind: input, shape index: {}]
  %s11 = inlined_call_operand.vmem [shape: f32[16,1], index: 11, kind: input, shape index: {}]
  %s12 = inlined_call_operand.vmem [shape: f32[16,1], index: 12, kind: input, shape index: {}]
  %s13 = inlined_call_operand.vmem [shape: bf16[8,16], index: 13, kind: input, shape index: {}]
  %s14 = inlined_call_operand.vmem [shape: bf16[9,8,4], index: 14, kind: input, shape index: {}]
  %s15 = inlined_call_operand.hbm [shape: f32[2,8,256], index: 15, kind: output, shape index: {}]
  %s16 = sld [smem:[#allocation0]]
  $region93: #{tpu_custom_call.1} parent=0
    _
  %s18 = ssub.s32 1, %s16
  %s19 = scalar_select 0, %s18, %s16
  $region1: #{tpu_custom_call.1} parent=0
    #allocation2 [shape = 'u8[16384]{0}', space=vmem, size = 0x4000, scoped, tag = 'output window, operand 0']
    #allocation3 [shape = 's32[2]{0}', space=sflag, size = 0x8, scoped, tag = 'scoped memory for tpu_custom_call.1']
    %20 = vsyncpa [#allocation3], 0
    %s21 = scalar_lea.sflag [#allocation3], 1
    %22 = vsyncpa %s21, 0
    loop: start=0, step=1, limit=4
    $region2: #{tpu_custom_call.1} parent=1 // loop_pre_header
      _
    $region3: #{tpu_custom_call.1} parent=1 // loop_header
      %s24 = sphi 0, %s28
      %p25 = scmp.ge.s32.totalorder %s24, 4
      %s34 = sphi 0, %s36
      %s37 = sphi 0, %s34
      %s38 = sphi 0, %s37
      %s54 = sphi 0, %s38
      %s58 = sphi 0, %s58
      %s60 = sphi 0, %s58
      %s61 = sphi 0, %s60
      %s75 = sphi 0, %s61
      %s79 = sphi 0, %s79
      %s81 = sphi 0, %s79
      %s82 = sphi 0, %s81
      %s96 = sphi 0, %s82
      %s100 = sphi 0, %s100
      %s102 = sphi 0, %s100
      %s103 = sphi 0, %s102
      %s117 = sphi 0, %s103
      %s121 = sphi 0, %s121
      %s123 = sphi 0, %s121
      %s124 = sphi 0, %s123
      %s138 = sphi 0, %s124
      %s142 = sphi 0, %s142
      %s144 = sphi 0, %s142
      %s145 = sphi 0, %s144
      %s159 = sphi 0, %s145
      %s163 = sphi 0, %s163
      %s165 = sphi 0, %s163
      %s166 = sphi 0, %s165
      %s180 = sphi 0, %s166
      %s184 = sphi 0, %s184
      %s186 = sphi 0, %s184
      %s187 = sphi 0, %s186
      %s201 = sphi 0, %s187
      %s205 = sphi 0, %s205
      %s207 = sphi 0, %s205
      %s208 = sphi 0, %s207
      %s222 = sphi 0, %s208
      %s226 = sphi 0, %s226
      %s228 = sphi 0, %s226
      %s229 = sphi 0, %s228
      %s243 = sphi 0, %s229
      %s247 = sphi 0, %s247
      %s249 = sphi 0, %s247
      %s250 = sphi 0, %s249
      %s264 = sphi 0, %s250
      %s268 = sphi 0, %s268
      %s270 = sphi 0, %s268
      %s271 = sphi 0, %s270
      %s285 = sphi 0, %s271
      %s289 = sphi 0, %s289
      %s291 = sphi 0, %s289
      %s292 = sphi 0, %s291
      %s306 = sphi 0, %s292
      %s310 = sphi 0, %s310
      %s312 = sphi 0, %s310
      %s313 = sphi 0, %s312
      %s327 = sphi 0, %s313
      %s331 = sphi 0, %s331
      %s333 = sphi 0, %s331
      %s334 = sphi 0, %s333
      %s348 = sphi 0, %s334
      %s354 = sphi 0, %s356
      %s357 = sphi 0, %s354
      %s358 = sphi 0, %s357
      %s374 = sphi 0, %s358
    $region4: #{tpu_custom_call.1} parent=1 // loop_header_branch
      %27 = sbr.rel (%p25) target = $region8
    $region5: #{tpu_custom_call.1} parent=1 // loop_body
      %s29 = ssub.s32 %s24, 1
      %s30 = ssub.s32 %s24, 2
      %s31 = sadd.s32 %s24, 1
      %s32 = ssub.s32 %s24, %s31
      %p33 = scmp.eq.s32.totalorder %s32, 0
      %s35 = sadd.s32 %s34, 1
      %s36 = scalar_select %p33, %s34, %s35
      %p39 = pneg %p33
      %p40 = scmp.eq.s32.totalorder %s24, 1
      %p41 = por %p39, %p40
      %p42 = scmp.ne.s32.totalorder %s34, %s37
      %p43 = scmp.eq.s32.totalorder %s24, 0
      %p44 = por %p42, %p43
      %p45 = scmp.ne.s32.totalorder %s34, %s37
      %p46 = scmp.eq.s32.totalorder %s29, 1
      %p47 = por %p45, %p46
      %p48 = scmp.ne.s32.totalorder %s37, %s38
      %p49 = scmp.eq.s32.totalorder %s29, 0
      %p50 = por %p48, %p49
      %p51 = scmp.ne.s32.totalorder %s37, %s38
      %p52 = scmp.eq.s32.totalorder %s30, 1
      %p53 = por %p51, %p52
      %p55 = scmp.ne.s32.totalorder %s38, %s54
      %p56 = scmp.eq.s32.totalorder %s30, 0
      %p57 = por %p55, %p56
      %s59 = sadd.s32 %s58, 1
      %p62 = scmp.eq.s32.totalorder %s24, 1
      %p63 = scmp.ne.s32.totalorder %s58, %s60
      %p64 = scmp.eq.s32.totalorder %s24, 0
      %p65 = por %p63, %p64
      %p66 = scmp.ne.s32.totalorder %s58, %s60
      %p67 = scmp.eq.s32.totalorder %s29, 1
      %p68 = por %p66, %p67
      %p69 = scmp.ne.s32.totalorder %s60, %s61
      %p70 = scmp.eq.s32.totalorder %s29, 0
      %p71 = por %p69, %p70
      %p72 = scmp.ne.s32.totalorder %s60, %s61
      %p73 = scmp.eq.s32.totalorder %s30, 1
      %p74 = por %p72, %p73
      %p76 = scmp.ne.s32.totalorder %s61, %s75
      %p77 = scmp.eq.s32.totalorder %s30, 0
      %p78 = por %p76, %p77
      %s80 = sadd.s32 %s79, 1
      %p83 = scmp.eq.s32.totalorder %s24, 1
      %p84 = scmp.ne.s32.totalorder %s79, %s81
      %p85 = scmp.eq.s32.totalorder %s24, 0
      %p86 = por %p84, %p85
      %p87 = scmp.ne.s32.totalorder %s79, %s81
      %p88 = scmp.eq.s32.totalorder %s29, 1
      %p89 = por %p87, %p88
      %p90 = scmp.ne.s32.totalorder %s81, %s82
      %p91 = scmp.eq.s32.totalorder %s29, 0
      %p92 = por %p90, %p91
      %p93 = scmp.ne.s32.totalorder %s81, %s82
      %p94 = scmp.eq.s32.totalorder %s30, 1
      %p95 = por %p93, %p94
      %p97 = scmp.ne.s32.totalorder %s82, %s96
      %p98 = scmp.eq.s32.totalorder %s30, 0
      %p99 = por %p97, %p98
      %s101 = sadd.s32 %s100, 1
      %p104 = scmp.eq.s32.totalorder %s24, 1
      %p105 = scmp.ne.s32.totalorder %s100, %s102
      %p106 = scmp.eq.s32.totalorder %s24, 0
      %p107 = por %p105, %p106
      %p108 = scmp.ne.s32.totalorder %s100, %s102
      %p109 = scmp.eq.s32.totalorder %s29, 1
      %p110 = por %p108, %p109
      %p111 = scmp.ne.s32.totalorder %s102, %s103
      %p112 = scmp.eq.s32.totalorder %s29, 0
      %p113 = por %p111, %p112
      %p114 = scmp.ne.s32.totalorder %s102, %s103
      %p115 = scmp.eq.s32.totalorder %s30, 1
      %p116 = por %p114, %p115
      %p118 = scmp.ne.s32.totalorder %s103, %s117
      %p119 = scmp.eq.s32.totalorder %s30, 0
      %p120 = por %p118, %p119
      %s122 = sadd.s32 %s121, 1
      %p125 = scmp.eq.s32.totalorder %s24, 1
      %p126 = scmp.ne.s32.totalorder %s121, %s123
      %p127 = scmp.eq.s32.totalorder %s24, 0
      %p128 = por %p126, %p127
      %p129 = scmp.ne.s32.totalorder %s121, %s123
      %p130 = scmp.eq.s32.totalorder %s29, 1
      %p131 = por %p129, %p130
      %p132 = scmp.ne.s32.totalorder %s123, %s124
      %p133 = scmp.eq.s32.totalorder %s29, 0
      %p134 = por %p132, %p133
      %p135 = scmp.ne.s32.totalorder %s123, %s124
      %p136 = scmp.eq.s32.totalorder %s30, 1
      %p137 = por %p135, %p136
      %p139 = scmp.ne.s32.totalorder %s124, %s138
      %p140 = scmp.eq.s32.totalorder %s30, 0
      %p141 = por %p139, %p140
      %s143 = sadd.s32 %s142, 1
      %p146 = scmp.eq.s32.totalorder %s24, 1
      %p147 = scmp.ne.s32.totalorder %s142, %s144
      %p148 = scmp.eq.s32.totalorder %s24, 0
      %p149 = por %p147, %p148
      %p150 = scmp.ne.s32.totalorder %s142, %s144
      %p151 = scmp.eq.s32.totalorder %s29, 1
      %p152 = por %p150, %p151
      %p153 = scmp.ne.s32.totalorder %s144, %s145
      %p154 = scmp.eq.s32.totalorder %s29, 0
      %p155 = por %p153, %p154
      %p156 = scmp.ne.s32.totalorder %s144, %s145
      %p157 = scmp.eq.s32.totalorder %s30, 1
      %p158 = por %p156, %p157
      %p160 = scmp.ne.s32.totalorder %s145, %s159
      %p161 = scmp.eq.s32.totalorder %s30, 0
      %p162 = por %p160, %p161
      %s164 = sadd.s32 %s163, 1
      %p167 = scmp.eq.s32.totalorder %s24, 1
      %p168 = scmp.ne.s32.totalorder %s163, %s165
      %p169 = scmp.eq.s32.totalorder %s24, 0
      %p170 = por %p168, %p169
      %p171 = scmp.ne.s32.totalorder %s163, %s165
      %p172 = scmp.eq.s32.totalorder %s29, 1
      %p173 = por %p171, %p172
      %p174 = scmp.ne.s32.totalorder %s165, %s166
      %p175 = scmp.eq.s32.totalorder %s29, 0
      %p176 = por %p174, %p175
      %p177 = scmp.ne.s32.totalorder %s165, %s166
      %p178 = scmp.eq.s32.totalorder %s30, 1
      %p179 = por %p177, %p178
      %p181 = scmp.ne.s32.totalorder %s166, %s180
      %p182 = scmp.eq.s32.totalorder %s30, 0
      %p183 = por %p181, %p182
      %s185 = sadd.s32 %s184, 1
      %p188 = scmp.eq.s32.totalorder %s24, 1
      %p189 = scmp.ne.s32.totalorder %s184, %s186
      %p190 = scmp.eq.s32.totalorder %s24, 0
      %p191 = por %p189, %p190
      %p192 = scmp.ne.s32.totalorder %s184, %s186
      %p193 = scmp.eq.s32.totalorder %s29, 1
      %p194 = por %p192, %p193
      %p195 = scmp.ne.s32.totalorder %s186, %s187
      %p196 = scmp.eq.s32.totalorder %s29, 0
      %p197 = por %p195, %p196
      %p198 = scmp.ne.s32.totalorder %s186, %s187
      %p199 = scmp.eq.s32.totalorder %s30, 1
      %p200 = por %p198, %p199
      %p202 = scmp.ne.s32.totalorder %s187, %s201
      %p203 = scmp.eq.s32.totalorder %s30, 0
      %p204 = por %p202, %p203
      %s206 = sadd.s32 %s205, 1
      %p209 = scmp.eq.s32.totalorder %s24, 1
      %p210 = scmp.ne.s32.totalorder %s205, %s207
      %p211 = scmp.eq.s32.totalorder %s24, 0
      %p212 = por %p210, %p211
      %p213 = scmp.ne.s32.totalorder %s205, %s207
      %p214 = scmp.eq.s32.totalorder %s29, 1
      %p215 = por %p213, %p214
      %p216 = scmp.ne.s32.totalorder %s207, %s208
      %p217 = scmp.eq.s32.totalorder %s29, 0
      %p218 = por %p216, %p217
      %p219 = scmp.ne.s32.totalorder %s207, %s208
      %p220 = scmp.eq.s32.totalorder %s30, 1
      %p221 = por %p219, %p220
      %p223 = scmp.ne.s32.totalorder %s208, %s222
      %p224 = scmp.eq.s32.totalorder %s30, 0
      %p225 = por %p223, %p224
      %s227 = sadd.s32 %s226, 1
      %p230 = scmp.eq.s32.totalorder %s24, 1
      %p231 = scmp.ne.s32.totalorder %s226, %s228
      %p232 = scmp.eq.s32.totalorder %s24, 0
      %p233 = por %p231, %p232
      %p234 = scmp.ne.s32.totalorder %s226, %s228
      %p235 = scmp.eq.s32.totalorder %s29, 1
      %p236 = por %p234, %p235
      %p237 = scmp.ne.s32.totalorder %s228, %s229
      %p238 = scmp.eq.s32.totalorder %s29, 0
      %p239 = por %p237, %p238
      %p240 = scmp.ne.s32.totalorder %s228, %s229
      %p241 = scmp.eq.s32.totalorder %s30, 1
      %p242 = por %p240, %p241
      %p244 = scmp.ne.s32.totalorder %s229, %s243
      %p245 = scmp.eq.s32.totalorder %s30, 0
      %p246 = por %p244, %p245
      %s248 = sadd.s32 %s247, 1
      %p251 = scmp.eq.s32.totalorder %s24, 1
      %p252 = scmp.ne.s32.totalorder %s247, %s249
      %p253 = scmp.eq.s32.totalorder %s24, 0
      %p254 = por %p252, %p253
      %p255 = scmp.ne.s32.totalorder %s247, %s249
      %p256 = scmp.eq.s32.totalorder %s29, 1
      %p257 = por %p255, %p256
      %p258 = scmp.ne.s32.totalorder %s249, %s250
      %p259 = scmp.eq.s32.totalorder %s29, 0
      %p260 = por %p258, %p259
      %p261 = scmp.ne.s32.totalorder %s249, %s250
      %p262 = scmp.eq.s32.totalorder %s30, 1
      %p263 = por %p261, %p262
      %p265 = scmp.ne.s32.totalorder %s250, %s264
      %p266 = scmp.eq.s32.totalorder %s30, 0
      %p267 = por %p265, %p266
      %s269 = sadd.s32 %s268, 1
      %p272 = scmp.eq.s32.totalorder %s24, 1
      %p273 = scmp.ne.s32.totalorder %s268, %s270
      %p274 = scmp.eq.s32.totalorder %s24, 0
      %p275 = por %p273, %p274
      %p276 = scmp.ne.s32.totalorder %s268, %s270
      %p277 = scmp.eq.s32.totalorder %s29, 1
      %p278 = por %p276, %p277
      %p279 = scmp.ne.s32.totalorder %s270, %s271
      %p280 = scmp.eq.s32.totalorder %s29, 0
      %p281 = por %p279, %p280
      %p282 = scmp.ne.s32.totalorder %s270, %s271
      %p283 = scmp.eq.s32.totalorder %s30, 1
      %p284 = por %p282, %p283
      %p286 = scmp.ne.s32.totalorder %s271, %s285
      %p287 = scmp.eq.s32.totalorder %s30, 0
      %p288 = por %p286, %p287
      %s290 = sadd.s32 %s289, 1
      %p293 = scmp.eq.s32.totalorder %s24, 1
      %p294 = scmp.ne.s32.totalorder %s289, %s291
      %p295 = scmp.eq.s32.totalorder %s24, 0
      %p296 = por %p294, %p295
      %p297 = scmp.ne.s32.totalorder %s289, %s291
      %p298 = scmp.eq.s32.totalorder %s29, 1
      %p299 = por %p297, %p298
      %p300 = scmp.ne.s32.totalorder %s291, %s292
      %p301 = scmp.eq.s32.totalorder %s29, 0
      %p302 = por %p300, %p301
      %p303 = scmp.ne.s32.totalorder %s291, %s292
      %p304 = scmp.eq.s32.totalorder %s30, 1
      %p305 = por %p303, %p304
      %p307 = scmp.ne.s32.totalorder %s292, %s306
      %p308 = scmp.eq.s32.totalorder %s30, 0
      %p309 = por %p307, %p308
      %s311 = sadd.s32 %s310, 1
      %p314 = scmp.eq.s32.totalorder %s24, 1
      %p315 = scmp.ne.s32.totalorder %s310, %s312
      %p316 = scmp.eq.s32.totalorder %s24, 0
      %p317 = por %p315, %p316
      %p318 = scmp.ne.s32.totalorder %s310, %s312
      %p319 = scmp.eq.s32.totalorder %s29, 1
      %p320 = por %p318, %p319
      %p321 = scmp.ne.s32.totalorder %s312, %s313
      %p322 = scmp.eq.s32.totalorder %s29, 0
      %p323 = por %p321, %p322
      %p324 = scmp.ne.s32.totalorder %s312, %s313
      %p325 = scmp.eq.s32.totalorder %s30, 1
      %p326 = por %p324, %p325
      %p328 = scmp.ne.s32.totalorder %s313, %s327
      %p329 = scmp.eq.s32.totalorder %s30, 0
      %p330 = por %p328, %p329
      %s332 = sadd.s32 %s331, 1
      %p335 = scmp.eq.s32.totalorder %s24, 1
      %p336 = scmp.ne.s32.totalorder %s331, %s333
      %p337 = scmp.eq.s32.totalorder %s24, 0
      %p338 = por %p336, %p337
      %p339 = scmp.ne.s32.totalorder %s331, %s333
      %p340 = scmp.eq.s32.totalorder %s29, 1
      %p341 = por %p339, %p340
      %p342 = scmp.ne.s32.totalorder %s333, %s334
      %p343 = scmp.eq.s32.totalorder %s29, 0
      %p344 = por %p342, %p343
      %p345 = scmp.ne.s32.totalorder %s333, %s334
      %p346 = scmp.eq.s32.totalorder %s30, 1
      %p347 = por %p345, %p346
      %p349 = scmp.ne.s32.totalorder %s334, %s348
      %p350 = scmp.eq.s32.totalorder %s30, 0
      %p351 = por %p349, %p350
      %s352 = ssub.s32 %s24, %s31
      %p353 = scmp.eq.s32.totalorder %s352, 0
      %s355 = sadd.s32 %s354, 1
      %s356 = scalar_select %p353, %s354, %s355
      %p359 = pneg %p353
      %p360 = scmp.eq.s32.totalorder %s24, 1
      %p361 = por %p359, %p360
      %p362 = scmp.ne.s32.totalorder %s354, %s357
      %p363 = scmp.eq.s32.totalorder %s24, 0
      %p364 = por %p362, %p363
      %p365 = scmp.ne.s32.totalorder %s354, %s357
      %p366 = scmp.eq.s32.totalorder %s29, 1
      %p367 = por %p365, %p366
      %p368 = scmp.ne.s32.totalorder %s357, %s358
      %p369 = scmp.eq.s32.totalorder %s29, 0
      %p370 = por %p368, %p369
      %p371 = scmp.ne.s32.totalorder %s357, %s358
      %p372 = scmp.eq.s32.totalorder %s30, 1
      %p373 = por %p371, %p372
      %p375 = scmp.ne.s32.totalorder %s358, %s374
      %p376 = scmp.eq.s32.totalorder %s30, 0
      %p377 = por %p375, %p376
      %p378 = scmp.le.s32.totalorder 1, %s24
      %p379 = scmp.lt.s32.totalorder %s24, 3
      %p380 = pnand %p378, %p379
      %p381 = pneg %p380
      // Predicated region
      $region9: #{tpu_custom_call.1} parent=5 // pred_check
        _
      $region10: #{tpu_custom_call.1} parent=5 // pred_check_branch
        %383 = sbr.rel (%p380) target = $region12
      $region11: #{tpu_custom_call.1} parent=5 // pred_region
        %s384 = ssub.s32 %s24, 1
        // Predicated region
        $region13: #{tpu_custom_call.1} parent=11 // pred_check
          %p385 = pneg %p71
        $region14: #{tpu_custom_call.1} parent=11 // pred_check_branch
          %387 = sbr.rel (%p385) target = $region16
        $region15: #{tpu_custom_call.1} parent=11 // pred_region
          _
        $region16: #{tpu_custom_call.1} parent=11 // pred_fallthru
          _
        // Predicated region
        $region17: #{tpu_custom_call.1} parent=11 // pred_check
          %p388 = pneg %p92
        $region18: #{tpu_custom_call.1} parent=11 // pred_check_branch
          %390 = sbr.rel (%p388) target = $region20
        $region19: #{tpu_custom_call.1} parent=11 // pred_region
          _
        $region20: #{tpu_custom_call.1} parent=11 // pred_fallthru
          _
        // Predicated region
        $region21: #{tpu_custom_call.1} parent=11 // pred_check
          %p391 = pneg %p113
        $region22: #{tpu_custom_call.1} parent=11 // pred_check_branch
          %393 = sbr.rel (%p391) target = $region24
        $region23: #{tpu_custom_call.1} parent=11 // pred_region
          _
        $region24: #{tpu_custom_call.1} parent=11 // pred_fallthru
          _
        // Predicated region
        $region25: #{tpu_custom_call.1} parent=11 // pred_check
          %p394 = pneg %p134
        $region26: #{tpu_custom_call.1} parent=11 // pred_check_branch
          %396 = sbr.rel (%p394) target = $region28
        $region27: #{tpu_custom_call.1} parent=11 // pred_region
          _
        $region28: #{tpu_custom_call.1} parent=11 // pred_fallthru
          _
        // Predicated region
        $region29: #{tpu_custom_call.1} parent=11 // pred_check
          %p397 = pneg %p155
        $region30: #{tpu_custom_call.1} parent=11 // pred_check_branch
          %399 = sbr.rel (%p397) target = $region32
        $region31: #{tpu_custom_call.1} parent=11 // pred_region
          _
        $region32: #{tpu_custom_call.1} parent=11 // pred_fallthru
          _
        // Predicated region
        $region33: #{tpu_custom_call.1} parent=11 // pred_check
          %p400 = pneg %p176
        $region34: #{tpu_custom_call.1} parent=11 // pred_check_branch
          %402 = sbr.rel (%p400) target = $region36
        $region35: #{tpu_custom_call.1} parent=11 // pred_region
          _
        $region36: #{tpu_custom_call.1} parent=11 // pred_fallthru
          _
        // Predicated region
        $region37: #{tpu_custom_call.1} parent=11 // pred_check
          %p403 = pneg %p197
        $region38: #{tpu_custom_call.1} parent=11 // pred_check_branch
          %405 = sbr.rel (%p403) target = $region40
        $region39: #{tpu_custom_call.1} parent=11 // pred_region
          _
        $region40: #{tpu_custom_call.1} parent=11 // pred_fallthru
          _
        // Predicated region
        $region41: #{tpu_custom_call.1} parent=11 // pred_check
          %p406 = pneg %p218
        $region42: #{tpu_custom_call.1} parent=11 // pred_check_branch
          %408 = sbr.rel (%p406) target = $region44
        $region43: #{tpu_custom_call.1} parent=11 // pred_region
          _
        $region44: #{tpu_custom_call.1} parent=11 // pred_fallthru
          _
        // Predicated region
        $region45: #{tpu_custom_call.1} parent=11 // pred_check
          %p409 = pneg %p239
        $region46: #{tpu_custom_call.1} parent=11 // pred_check_branch
          %411 = sbr.rel (%p409) target = $region48
        $region47: #{tpu_custom_call.1} parent=11 // pred_region
          _
        $region48: #{tpu_custom_call.1} parent=11 // pred_fallthru
          _
        // Predicated region
        $region49: #{tpu_custom_call.1} parent=11 // pred_check
          %p412 = pneg %p260
        $region50: #{tpu_custom_call.1} parent=11 // pred_check_branch
          %414 = sbr.rel (%p412) target = $region52
        $region51: #{tpu_custom_call.1} parent=11 // pred_region
          _
        $region52: #{tpu_custom_call.1} parent=11 // pred_fallthru
          _
        // Predicated region
        $region53: #{tpu_custom_call.1} parent=11 // pred_check
          %p415 = pneg %p281
        $region54: #{tpu_custom_call.1} parent=11 // pred_check_branch
          %417 = sbr.rel (%p415) target = $region56
        $region55: #{tpu_custom_call.1} parent=11 // pred_region
          _
        $region56: #{tpu_custom_call.1} parent=11 // pred_fallthru
          _
        // Predicated region
        $region57: #{tpu_custom_call.1} parent=11 // pred_check
          %p418 = pneg %p302
        $region58: #{tpu_custom_call.1} parent=11 // pred_check_branch
          %420 = sbr.rel (%p418) target = $region60
        $region59: #{tpu_custom_call.1} parent=11 // pred_region
          _
        $region60: #{tpu_custom_call.1} parent=11 // pred_fallthru
          _
        // Predicated region
        $region61: #{tpu_custom_call.1} parent=11 // pred_check
          %p421 = pneg %p323
        $region62: #{tpu_custom_call.1} parent=11 // pred_check_branch
          %423 = sbr.rel (%p421) target = $region64
        $region63: #{tpu_custom_call.1} parent=11 // pred_region
          _
        $region64: #{tpu_custom_call.1} parent=11 // pred_fallthru
          _
        // Predicated region
        $region65: #{tpu_custom_call.1} parent=11 // pred_check
          %p424 = pneg %p344
        $region66: #{tpu_custom_call.1} parent=11 // pred_check_branch
          %426 = sbr.rel (%p424) target = $region68
        $region67: #{tpu_custom_call.1} parent=11 // pred_region
          _
        $region68: #{tpu_custom_call.1} parent=11 // pred_fallthru
          _
      $region12: #{tpu_custom_call.1} parent=5 // pred_fallthru
        _
      %p427 = scmp.lt.s32.totalorder %s24, 2
      // Predicated region
      $region69: #{tpu_custom_call.1} parent=5 // pred_check
        %p428 = pneg %p427
      $region70: #{tpu_custom_call.1} parent=5 // pred_check_branch
        %430 = sbr.rel (%p428) target = $region72
      $region71: #{tpu_custom_call.1} parent=5 // pred_region
        // Predicated region
        $region73: #{tpu_custom_call.1} parent=71 // pred_check
          %p431 = pneg %p44
        $region74: #{tpu_custom_call.1} parent=71 // pred_check_branch
          %433 = sbr.rel (%p431) target = $region76
        $region75: #{tpu_custom_call.1} parent=71 // pred_region
          %p434 = scmp.lt.s32.totalorder %s24, 1
          %s435 = scalar_select %p434, %s24, 1
          %s436 = smul.addr %s435, 2
          %s437 = smul.addr %s436, 4
          %s438 = scalar_lea.vmem %s0, %s437
        $region76: #{tpu_custom_call.1} parent=71 // pred_fallthru
          _
      $region72: #{tpu_custom_call.1} parent=5 // pred_fallthru
        _
      %p439 = scmp.le.s32.totalorder 1, %s24
      %p440 = scmp.lt.s32.totalorder %s24, 3
      %p441 = pnand %p439, %p440
      %p442 = pneg %p441
      // Predicated region
      $region77: #{tpu_custom_call.1} parent=5 // pred_check
        _
      $region78: #{tpu_custom_call.1} parent=5 // pred_check_branch
        %444 = sbr.rel (%p441) target = $region80
      $region79: #{tpu_custom_call.1} parent=5 // pred_region
        %s445 = ssub.s32 %s24, 1
        %p446 = scmp.lt.s32.totalorder %s29, 1
        %s447 = scalar_select %p446, %s29, 1
        %s448 = smul.addr %s447, 2
        %s449 = smul.addr %s448, 4
        %s450 = scalar_lea.vmem %s0, %s449
        %p451 = pneg %p50
        %p452 = pneg %p47
        %p453 = pneg %p71
        %p454 = pneg %p68
        %p455 = pneg %p92
        %p456 = pneg %p89
        %p457 = pneg %p113
        %p458 = pneg %p110
        %p459 = pneg %p134
        %p460 = pneg %p131
        %p461 = pneg %p155
        %p462 = pneg %p152
        %p463 = pneg %p176
        %p464 = pneg %p173
        %p465 = pneg %p197
        %p466 = pneg %p194
        %p467 = pneg %p218
        %p468 = pneg %p215
        %p469 = pneg %p239
        %p470 = pneg %p236
        %p471 = pneg %p260
        %p472 = pneg %p257
        %p473 = pneg %p281
        %p474 = pneg %p278
        %p475 = pneg %p302
        %p476 = pneg %p299
        %p477 = pneg %p323
        %p478 = pneg %p320
        %p479 = pneg %p344
        %p480 = pneg %p341
        %p481 = pneg %p370
        %p482 = pneg %p367
        %s483 = sand.u32 %s357, 1
        %s484 = scalar_lea.sflag [#allocation3], %s483
        %s485 = sand.u32 %s357, 1
        %s486 = smul.addr %s485, 16
        %s487 = scalar_lea.vmem [#allocation2], %s486
        %p488 = scmp.lt.s32.totalorder %s29, 1
        %s489 = scalar_select %p488, %s29, 1
        %s490 = smul.addr %s489, 2
        %s491 = smul.addr %s490, 4
        %s492 = scalar_lea.vmem %s0, %s491
        %v494 = vlaneseq
        %v495 = vand.u32 %v494, 127
        %v496 = vadd.s32 %v495, 128
        %vm497 = vcmp.lt.s32.totalorder %v495, 0
        %v498 = vsub.s32 0, %v495
        %v499 = vsel %vm497, %v498, %v495
        %v500 = vshrl.u32 %v499, 4
        %v501 = vand.u32 %v499, 15
        %v502 = vsub.s32 0, %v501
        %v503 = vsel %vm497, %v502, %v501
        %vm504 = vcmp.lt.s32.totalorder %v496, 0
        %v505 = vsub.s32 0, %v496
        %v506 = vsel %vm504, %v505, %v496
        %v507 = vshrl.u32 %v506, 4
        %v508 = vand.u32 %v506, 15
        %v509 = vsub.s32 0, %v508
        %v510 = vsel %vm504, %v509, %v508
        %vm511 = vcmp.ne.s32.totalorder %v503, 0
        %vm512 = vcmp.ne.s32.totalorder %v510, 0
        %vm513 = vcmp.lt.s32.totalorder %v503, 0
        %vm514 = vcmp.lt.s32.totalorder %v510, 0
        %vm515 = vmand %vm513, %vm511
        %vm516 = vmand %vm514, %vm512
        %v517 = vadd.s32 %v503, 16
        %v518 = vadd.s32 %v510, 16
        %v519 = vsel %vm515, %v517, %v503
        %v520 = vsel %vm516, %v518, %v510
        %vm521 = vcmp.ge.s32.totalorder %v495, 16
        %vm522 = vcmp.ge.s32.totalorder %v496, 16
        %vm523 = vcmp.lt.s32.totalorder %v495, 240
        %vm524 = vcmp.lt.s32.totalorder %v496, 240
        %vm525 = vcmp.ge.s32.totalorder %v519, 1
        %vm526 = vcmp.ge.s32.totalorder %v520, 1
        %vm527 = vcmp.le.s32.totalorder %v519, 14
        %vm528 = vcmp.le.s32.totalorder %v520, 14
        %vm529 = vmand %vm521, %vm525
        %vm530 = vmand %vm522, %vm526
        %vm531 = vmand %vm521, %vm527
        %vm532 = vmand %vm522, %vm528
        %vm533 = vmand %vm523, %vm525
        %vm534 = vmand %vm524, %vm526
        %vm535 = vmand %vm523, %vm527
        %vm536 = vmand %vm524, %vm528
        %v537 = vld [vmem:[%s492] sm:$0xff]
        %v538 = vld [vmem:[%s1] sm:$0xf]
        %540 = vset.pattern.permute.xlu0 0
        %541 = vperm.xlu0 %540, %v538
        %v542 = vpop.permute.xlu0 %541
        %v544 = vunpack.c.l.s4 839922192
        %v545 = vunpack.c.0.s8 %v544
        %v546 = vlaneseq
        %v547 = vshrl.u32 %v546, 7
        %v548 = vsub.s32 %v545, %v547
        %v549 = vrot.slane %v542, %v548
        %v551 = vmul.f32 %v537, %v549
        %v552 = vld [vmem:[%s2] sm:$0xf]
        %554 = vset.pattern.permute.xlu0 0
        %555 = vperm.xlu0 %554, %v552
        %v556 = vpop.permute.xlu0 %555
        %v558 = vunpack.c.l.s4 839922192
        %v559 = vunpack.c.0.s8 %v558
        %v560 = vlaneseq
        %v561 = vshrl.u32 %v560, 7
        %v562 = vsub.s32 %v559, %v561
        %v563 = vrot.slane %v556, %v562
        %v565 = vadd.f32 %v551, %v563
        %v566 = vmax.f32 %v565, 0.0
        %v567 = vld [vmem:[%s3] sm:$0xf]
        %v568 = vld [vmem:[%s3 + $0x4] sm:$0xf]
        %v570 = vcombine.high %v566, %v566
        %v572 = vpack.c.bf16 %v566, %v566
        %v573 = vpack.c.bf16 %v570, %v570
        %v576 = vunpack.c.l.b16 %v567
        %v577 = vunpack.c.l.b16 %v568
        %v578 = vpack.c.b16 %v577, %v576
        %vm579 = vcmask 31744
        %v581 = vsel %vm579, %v578, 0
        %vm583 = vcmask 1041408
        %v585 = vsel %vm583, %v572, 0
        %v588 = vsel %vm583, %v573, 0
        %590 = vmatprep.subr.bf16.mxu0 %v588
        %591 = vmatpush1.bf16.msra.mxu0 %v585
        %592 = vmatprep.subr.bf16.mxu0 0
        %593 = vmatpush1.bf16.msra.mxu0 0
        %594 = vmatprep.subr.bf16.mxu0 0
        %595 = vmatpush1.bf16.msra.mxu0 0
        %596 = vmatprep.subr.bf16.mxu0 0
        %597 = vmatpush1.bf16.msra.mxu0 0
        %598 = vmatprep.subr.bf16.mxu0 0
        %599 = vmatpush1.bf16.msra.mxu0 0
        %600 = vmatprep.subr.bf16.mxu0 0
        %601 = vmatpush1.bf16.msra.mxu0 0
        %602 = vmatprep.subr.bf16.mxu0 0
        %603 = vmatpush1.bf16.msra.mxu0 0
        %604 = vmatprep.subr.bf16.mxu0 0
        %605 = vmatpush1.bf16.msra.mxu0 0
        %606 = vmatprep.subr.bf16.mxu0 0
        %607 = vmatpush1.bf16.msra.mxu0 0
        %608 = vmatprep.subr.bf16.mxu0 0
        %609 = vmatpush1.bf16.msra.mxu0 0
        %610 = vmatprep.subr.bf16.mxu0 0
        %611 = vmatpush1.bf16.msra.mxu0 0
        %612 = vmatprep.subr.bf16.mxu0 0
        %613 = vmatpush1.bf16.msra.mxu0 0
        %614 = vmatprep.subr.bf16.mxu0 0
        %615 = vmatpush1.bf16.msra.mxu0 0
        %616 = vmatprep.subr.bf16.mxu0 0
        %617 = vmatpush1.bf16.msra.mxu0 0
        %618 = vmatprep.subr.bf16.mxu0 0
        %619 = vmatpush1.bf16.msra.mxu0 0
        %620 = vmatprep.subr.bf16.mxu0 0
        %621 = vmatpush1.bf16.msra.mxu0 0
        %622 = vmatprep.mubr.bf16.mxu0 0
        %623 = vmatmul.mubr.bf16.gmra.mrb[0].mxu0 %v581
        %v624 = vpop.f32.mrb[0].mxu0
        %v625 = vadd.f32 0.0, %v624
        %v626 = vpop.f32.mrb[0].mxu0
        %v627 = vadd.f32 0.0, %v626
        %v628 = vpop.f32.mrb[0].mxu0
        %v629 = vadd.f32 0.0, %v628
        %v630 = vpop.f32.mrb[0].mxu0
        %v631 = vadd.f32 0.0, %v630
        %632 = vdwg.mxu0
        %v633 = vld [vmem:[%s4] sm:$0xff]
        %v634 = vld [vmem:[%s4 + $0x8] sm:$0xff]
        %636 = vset.pattern.permute.xlu0 0
        %637 = vperm.xlu0 %636, %v633
        %v638 = vpop.permute.xlu0 %637
        %641 = vset.pattern.permute.xlu0 0
        %642 = vperm.xlu0 %641, %v634
        %v643 = vpop.permute.xlu0 %642
        %v645 = vmul.f32 %v625, %v638
        %v646 = vmul.f32 %v627, %v638
        %v647 = vmul.f32 %v629, %v643
        %v648 = vmul.f32 %v631, %v643
        %v649 = vld [vmem:[%s5] sm:$0xff]
        %v650 = vld [vmem:[%s5 + $0x8] sm:$0xff]
        %652 = vset.pattern.permute.xlu0 0
        %653 = vperm.xlu0 %652, %v649
        %v654 = vpop.permute.xlu0 %653
        %657 = vset.pattern.permute.xlu0 0
        %658 = vperm.xlu0 %657, %v650
        %v659 = vpop.permute.xlu0 %658
        %v661 = vadd.f32 %v645, %v654
        %v662 = vadd.f32 %v646, %v654
        %v663 = vadd.f32 %v647, %v659
        %v664 = vadd.f32 %v648, %v659
        %v665 = vmax.f32 %v661, 0.0
        %v666 = vmax.f32 %v662, 0.0
        %v667 = vmax.f32 %v663, 0.0
        %v668 = vmax.f32 %v664, 0.0
        %669 = vrot.lane.b32.xlu0 %v665, 17
        %v670 = vpop.permute.xlu0 %669
        %671 = vrot.lane.b32.xlu0 %v667, 17
        %v672 = vpop.permute.xlu0 %671
        %673 = vrot.lane.b32.xlu0 %v666, 17
        %v674 = vpop.permute.xlu0 %673
        %675 = vrot.lane.b32.xlu0 %v668, 17
        %v676 = vpop.permute.xlu0 %675
        %vm677 = vcmp.lt.s32.totalorder %v495, 17
        %v678 = vsel %vm677, %v670, %v674
        %v679 = vsel %vm677, %v672, %v676
        %v680 = vsel %vm677, %v674, %v670
        %v681 = vsel %vm677, %v676, %v672
        %v683 = vcombine.high %v537, %v537
        %685 = vrot.lane.b32.xlu0 %v537, 17
        %v686 = vpop.permute.xlu0 %685
        %687 = vrot.lane.b32.xlu0 %v683, 17
        %v688 = vpop.permute.xlu0 %687
        %v689 = vsel %vm677, %v686, %v688
        %v690 = vsel %vm677, %v688, %v686
        %v691 = vsel %vm529, 1, 0
        %v692 = vsel %vm530, 1, 0
        %vm693 = vcmp.eq.s32.totalorder %v691, 1
        %vm694 = vcmp.eq.s32.totalorder %v692, 1
        %v695 = vsel %vm693, %v680, 0.0
        %v696 = vsel %vm694, %v678, 0.0
        %v697 = vsel %vm693, %v681, 0.0
        %v698 = vsel %vm694, %v679, 0.0
        %v699 = vsel %vm693, %v690, 0.0
        %v700 = vsel %vm694, %v689, 0.0
        %v701 = vld [vmem:[%s6] sm:$0xff]
        %v702 = vld [vmem:[%s6 + $0x8] sm:$0xff]
        %704 = vset.pattern.permute.xlu0 0
        %705 = vperm.xlu0 %704, %v701
        %v706 = vpop.permute.xlu0 %705
        %709 = vset.pattern.permute.xlu0 0
        %710 = vperm.xlu0 %709, %v702
        %v711 = vpop.permute.xlu0 %710
        %v713 = vmul.f32 %v695, %v706
        %v714 = vmul.f32 %v696, %v706
        %v715 = vmul.f32 %v697, %v711
        %v716 = vmul.f32 %v698, %v711
        %v717 = vadd.f32 %v713, 0.0
        %v718 = vadd.f32 %v714, 0.0
        %v719 = vadd.f32 %v715, 0.0
        %v720 = vadd.f32 %v716, 0.0
        %v721 = vld [vmem:[%s14] sm:$0xf]
        %v722 = vpack.c.bf16 %v699, %v699
        %v723 = vpack.c.bf16 %v700, %v700
        %724 = vrot.lane.b32.xlu0 %v665, 16
        %v725 = vpop.permute.xlu0 %724
        %726 = vrot.lane.b32.xlu0 %v667, 16
        %v727 = vpop.permute.xlu0 %726
        %728 = vrot.lane.b32.xlu0 %v666, 16
        %v729 = vpop.permute.xlu0 %728
        %730 = vrot.lane.b32.xlu0 %v668, 16
        %v731 = vpop.permute.xlu0 %730
        %vm732 = vcmp.lt.s32.totalorder %v495, 16
        %v733 = vsel %vm732, %v725, %v729
        %v734 = vsel %vm732, %v727, %v731
        %v735 = vsel %vm732, %v729, %v725
        %v736 = vsel %vm732, %v731, %v727
        %737 = vrot.lane.b32.xlu0 %v537, 16
        %v738 = vpop.permute.xlu0 %737
        %739 = vrot.lane.b32.xlu0 %v683, 16
        %v740 = vpop.permute.xlu0 %739
        %v741 = vsel %vm732, %v738, %v740
        %v742 = vsel %vm732, %v740, %v738
        %v743 = vsel %vm521, 1, 0
        %v744 = vsel %vm522, 1, 0
        %vm745 = vcmp.eq.s32.totalorder %v743, 1
        %vm746 = vcmp.eq.s32.totalorder %v744, 1
        %v747 = vsel %vm745, %v735, 0.0
        %v748 = vsel %vm746, %v733, 0.0
        %v749 = vsel %vm745, %v736, 0.0
        %v750 = vsel %vm746, %v734, 0.0
        %v751 = vsel %vm745, %v742, 0.0
        %v752 = vsel %vm746, %v741, 0.0
        %s753 = scalar_lea.vmem %s6, 16
        %v754 = vld [vmem:[%s753] sm:$0xff]
        %v755 = vld [vmem:[%s753 + $0x8] sm:$0xff]
        %757 = vset.pattern.permute.xlu0 0
        %758 = vperm.xlu0 %757, %v754
        %v759 = vpop.permute.xlu0 %758
        %762 = vset.pattern.permute.xlu0 0
        %763 = vperm.xlu0 %762, %v755
        %v764 = vpop.permute.xlu0 %763
        %v766 = vmul.f32 %v747, %v759
        %v767 = vmul.f32 %v748, %v759
        %v768 = vmul.f32 %v749, %v764
        %v769 = vmul.f32 %v750, %v764
        %v770 = vadd.f32 %v717, %v766
        %v771 = vadd.f32 %v718, %v767
        %v772 = vadd.f32 %v719, %v768
        %v773 = vadd.f32 %v720, %v769
        %s774 = scalar_lea.vmem %s14, 4
        %v775 = vld [vmem:[%s774] sm:$0xf]
        %v776 = vpack.c.bf16 %v751, %v751
        %v777 = vpack.c.bf16 %v752, %v752
        %v779 = vsel %vm579, %v775, 0
        %v782 = vsel %vm583, %v776, 0
        %v785 = vsel %vm583, %v777, 0
        %787 = vmatprep.subr.bf16.mxu0 %v785
        %788 = vmatpush1.bf16.msra.mxu0 %v782
        %789 = vmatprep.subr.bf16.mxu0 0
        %790 = vmatpush1.bf16.msra.mxu0 0
        %791 = vmatprep.subr.bf16.mxu0 0
        %792 = vmatpush1.bf16.msra.mxu0 0
        %793 = vmatprep.subr.bf16.mxu0 0
        %794 = vmatpush1.bf16.msra.mxu0 0
        %795 = vmatprep.subr.bf16.mxu0 0
        %796 = vmatpush1.bf16.msra.mxu0 0
        %797 = vmatprep.subr.bf16.mxu0 0
        %798 = vmatpush1.bf16.msra.mxu0 0
        %799 = vmatprep.subr.bf16.mxu0 0
        %800 = vmatpush1.bf16.msra.mxu0 0
        %801 = vmatprep.subr.bf16.mxu0 0
        %802 = vmatpush1.bf16.msra.mxu0 0
        %803 = vmatprep.subr.bf16.mxu0 0
        %804 = vmatpush1.bf16.msra.mxu0 0
        %805 = vmatprep.subr.bf16.mxu0 0
        %806 = vmatpush1.bf16.msra.mxu0 0
        %807 = vmatprep.subr.bf16.mxu0 0
        %808 = vmatpush1.bf16.msra.mxu0 0
        %809 = vmatprep.subr.bf16.mxu0 0
        %810 = vmatpush1.bf16.msra.mxu0 0
        %811 = vmatprep.subr.bf16.mxu0 0
        %812 = vmatpush1.bf16.msra.mxu0 0
        %813 = vmatprep.subr.bf16.mxu0 0
        %814 = vmatpush1.bf16.msra.mxu0 0
        %815 = vmatprep.subr.bf16.mxu0 0
        %816 = vmatpush1.bf16.msra.mxu0 0
        %817 = vmatprep.subr.bf16.mxu0 0
        %818 = vmatpush1.bf16.msra.mxu0 0
        %819 = vmatprep.mubr.bf16.mxu0 0
        %820 = vmatmul.mubr.bf16.gmra.mrb[0].mxu0 %v779
        %v821 = vpop.f32.mrb[0].mxu0
        %v822 = vadd.f32 0.0, %v821
        %v823 = vpop.f32.mrb[0].mxu0
        %v824 = vadd.f32 0.0, %v823
        %v825 = vpop.f32.mrb[0].mxu0
        %v826 = vpop.f32.mrb[0].mxu0
        %827 = vdwg.mxu0
        %v829 = vsel %vm579, %v721, 0
        %v832 = vsel %vm583, %v722, 0
        %v835 = vsel %vm583, %v723, 0
        %837 = vmatprep.subr.bf16.mxu0 %v835
        %838 = vmatpush1.bf16.msra.mxu0 %v832
        %839 = vmatprep.subr.bf16.mxu0 0
        %840 = vmatpush1.bf16.msra.mxu0 0
        %841 = vmatprep.subr.bf16.mxu0 0
        %842 = vmatpush1.bf16.msra.mxu0 0
        %843 = vmatprep.subr.bf16.mxu0 0
        %844 = vmatpush1.bf16.msra.mxu0 0
        %845 = vmatprep.subr.bf16.mxu0 0
        %846 = vmatpush1.bf16.msra.mxu0 0
        %847 = vmatprep.subr.bf16.mxu0 0
        %848 = vmatpush1.bf16.msra.mxu0 0
        %849 = vmatprep.subr.bf16.mxu0 0
        %850 = vmatpush1.bf16.msra.mxu0 0
        %851 = vmatprep.subr.bf16.mxu0 0
        %852 = vmatpush1.bf16.msra.mxu0 0
        %853 = vmatprep.subr.bf16.mxu0 0
        %854 = vmatpush1.bf16.msra.mxu0 0
        %855 = vmatprep.subr.bf16.mxu0 0
        %856 = vmatpush1.bf16.msra.mxu0 0
        %857 = vmatprep.subr.bf16.mxu0 0
        %858 = vmatpush1.bf16.msra.mxu0 0
        %859 = vmatprep.subr.bf16.mxu0 0
        %860 = vmatpush1.bf16.msra.mxu0 0
        %861 = vmatprep.subr.bf16.mxu0 0
        %862 = vmatpush1.bf16.msra.mxu0 0
        %863 = vmatprep.subr.bf16.mxu0 0
        %864 = vmatpush1.bf16.msra.mxu0 0
        %865 = vmatprep.subr.bf16.mxu0 0
        %866 = vmatpush1.bf16.msra.mxu0 0
        %867 = vmatprep.subr.bf16.mxu0 0
        %868 = vmatpush1.bf16.msra.mxu0 0
        %869 = vmatprep.mubr.bf16.mxu0 0
        %870 = vmatmul.mubr.bf16.gmra.mrb[0].mxu0 %v829
        %v871 = vpop.f32.mrb[0].mxu0
        %v872 = vadd.f32 %v822, %v871
        %v873 = vpop.f32.mrb[0].mxu0
        %v874 = vadd.f32 %v824, %v873
        %v875 = vpop.f32.mrb[0].mxu0
        %v876 = vpop.f32.mrb[0].mxu0
        %877 = vdwg.mxu0
        %878 = vrot.lane.b32.xlu0 %v665, 15
        %v879 = vpop.permute.xlu0 %878
        %880 = vrot.lane.b32.xlu0 %v667, 15
        %v881 = vpop.permute.xlu0 %880
        %882 = vrot.lane.b32.xlu0 %v666, 15
        %v883 = vpop.permute.xlu0 %882
        %884 = vrot.lane.b32.xlu0 %v668, 15
        %v885 = vpop.permute.xlu0 %884
        %vm886 = vcmp.lt.s32.totalorder %v495, 15
        %v887 = vsel %vm886, %v879, %v883
        %v888 = vsel %vm886, %v881, %v885
        %v889 = vsel %vm886, %v883, %v879
        %v890 = vsel %vm886, %v885, %v881
        %891 = vrot.lane.b32.xlu0 %v537, 15
        %v892 = vpop.permute.xlu0 %891
        %893 = vrot.lane.b32.xlu0 %v683, 15
        %v894 = vpop.permute.xlu0 %893
        %v895 = vsel %vm886, %v892, %v894
        %v896 = vsel %vm886, %v894, %v892
        %v897 = vsel %vm531, 1, 0
        %v898 = vsel %vm532, 1, 0
        %vm899 = vcmp.eq.s32.totalorder %v897, 1
        %vm900 = vcmp.eq.s32.totalorder %v898, 1
        %v901 = vsel %vm899, %v889, 0.0
        %v902 = vsel %vm900, %v887, 0.0
        %v903 = vsel %vm899, %v890, 0.0
        %v904 = vsel %vm900, %v888, 0.0
        %v905 = vsel %vm899, %v896, 0.0
        %v906 = vsel %vm900, %v895, 0.0
        %s907 = scalar_lea.vmem %s6, 32
        %v908 = vld [vmem:[%s907] sm:$0xff]
        %v909 = vld [vmem:[%s907 + $0x8] sm:$0xff]
        %911 = vset.pattern.permute.xlu0 0
        %912 = vperm.xlu0 %911, %v908
        %v913 = vpop.permute.xlu0 %912
        %916 = vset.pattern.permute.xlu0 0
        %917 = vperm.xlu0 %916, %v909
        %v918 = vpop.permute.xlu0 %917
        %v920 = vmul.f32 %v901, %v913
        %v921 = vmul.f32 %v902, %v913
        %v922 = vmul.f32 %v903, %v918
        %v923 = vmul.f32 %v904, %v918
        %v924 = vadd.f32 %v770, %v920
        %v925 = vadd.f32 %v771, %v921
        %v926 = vadd.f32 %v772, %v922
        %v927 = vadd.f32 %v773, %v923
        %s928 = scalar_lea.vmem %s14, 8
        %v929 = vld [vmem:[%s928] sm:$0xf]
        %v930 = vpack.c.bf16 %v905, %v905
        %v931 = vpack.c.bf16 %v906, %v906
        %v933 = vsel %vm579, %v929, 0
        %v936 = vsel %vm583, %v930, 0
        %v939 = vsel %vm583, %v931, 0
        %941 = vmatprep.subr.bf16.mxu0 %v939
        %942 = vmatpush1.bf16.msra.mxu0 %v936
        %943 = vmatprep.subr.bf16.mxu0 0
        %944 = vmatpush1.bf16.msra.mxu0 0
        %945 = vmatprep.subr.bf16.mxu0 0
        %946 = vmatpush1.bf16.msra.mxu0 0
        %947 = vmatprep.subr.bf16.mxu0 0
        %948 = vmatpush1.bf16.msra.mxu0 0
        %949 = vmatprep.subr.bf16.mxu0 0
        %950 = vmatpush1.bf16.msra.mxu0 0
        %951 = vmatprep.subr.bf16.mxu0 0
        %952 = vmatpush1.bf16.msra.mxu0 0
        %953 = vmatprep.subr.bf16.mxu0 0
        %954 = vmatpush1.bf16.msra.mxu0 0
        %955 = vmatprep.subr.bf16.mxu0 0
        %956 = vmatpush1.bf16.msra.mxu0 0
        %957 = vmatprep.subr.bf16.mxu0 0
        %958 = vmatpush1.bf16.msra.mxu0 0
        %959 = vmatprep.subr.bf16.mxu0 0
        %960 = vmatpush1.bf16.msra.mxu0 0
        %961 = vmatprep.subr.bf16.mxu0 0
        %962 = vmatpush1.bf16.msra.mxu0 0
        %963 = vmatprep.subr.bf16.mxu0 0
        %964 = vmatpush1.bf16.msra.mxu0 0
        %965 = vmatprep.subr.bf16.mxu0 0
        %966 = vmatpush1.bf16.msra.mxu0 0
        %967 = vmatprep.subr.bf16.mxu0 0
        %968 = vmatpush1.bf16.msra.mxu0 0
        %969 = vmatprep.subr.bf16.mxu0 0
        %970 = vmatpush1.bf16.msra.mxu0 0
        %971 = vmatprep.subr.bf16.mxu0 0
        %972 = vmatpush1.bf16.msra.mxu0 0
        %973 = vmatprep.mubr.bf16.mxu0 0
        %974 = vmatmul.mubr.bf16.gmra.mrb[0].mxu0 %v933
        %v975 = vpop.f32.mrb[0].mxu0
        %v976 = vadd.f32 0.0, %v975
        %v977 = vpop.f32.mrb[0].mxu0
        %v978 = vadd.f32 0.0, %v977
        %v979 = vpop.f32.mrb[0].mxu0
        %v980 = vpop.f32.mrb[0].mxu0
        %981 = vdwg.mxu0
        %v982 = vadd.f32 %v872, %v976
        %v983 = vadd.f32 %v874, %v978
        %984 = vrot.lane.b32.xlu0 %v665, 1
        %v985 = vpop.permute.xlu0 %984
        %986 = vrot.lane.b32.xlu0 %v667, 1
        %v987 = vpop.permute.xlu0 %986
        %988 = vrot.lane.b32.xlu0 %v666, 1
        %v989 = vpop.permute.xlu0 %988
        %990 = vrot.lane.b32.xlu0 %v668, 1
        %v991 = vpop.permute.xlu0 %990
        %vm992 = vcmp.lt.s32.totalorder %v495, 1
        %v993 = vsel %vm992, %v985, %v989
        %v994 = vsel %vm992, %v987, %v991
        %v995 = vsel %vm992, %v989, %v985
        %v996 = vsel %vm992, %v991, %v987
        %997 = vrot.lane.b32.xlu0 %v537, 1
        %v998 = vpop.permute.xlu0 %997
        %999 = vrot.lane.b32.xlu0 %v683, 1
        %v1000 = vpop.permute.xlu0 %999
        %v1001 = vsel %vm992, %v998, %v1000
        %v1002 = vsel %vm992, %v1000, %v998
        %v1003 = vsel %vm525, 1, 0
        %v1004 = vsel %vm526, 1, 0
        %vm1005 = vcmp.eq.s32.totalorder %v1003, 1
        %vm1006 = vcmp.eq.s32.totalorder %v1004, 1
        %v1007 = vsel %vm1005, %v995, 0.0
        %v1008 = vsel %vm1006, %v993, 0.0
        %v1009 = vsel %vm1005, %v996, 0.0
        %v1010 = vsel %vm1006, %v994, 0.0
        %v1011 = vsel %vm1005, %v1002, 0.0
        %v1012 = vsel %vm1006, %v1001, 0.0
        %s1013 = scalar_lea.vmem %s6, 48
        %v1014 = vld [vmem:[%s1013] sm:$0xff]
        %v1015 = vld [vmem:[%s1013 + $0x8] sm:$0xff]
        %1017 = vset.pattern.permute.xlu0 0
        %1018 = vperm.xlu0 %1017, %v1014
        %v1019 = vpop.permute.xlu0 %1018
        %1022 = vset.pattern.permute.xlu0 0
        %1023 = vperm.xlu0 %1022, %v1015
        %v1024 = vpop.permute.xlu0 %1023
        %v1026 = vmul.f32 %v1007, %v1019
        %v1027 = vmul.f32 %v1008, %v1019
        %v1028 = vmul.f32 %v1009, %v1024
        %v1029 = vmul.f32 %v1010, %v1024
        %v1030 = vadd.f32 %v924, %v1026
        %v1031 = vadd.f32 %v925, %v1027
        %v1032 = vadd.f32 %v926, %v1028
        %v1033 = vadd.f32 %v927, %v1029
        %s1034 = scalar_lea.vmem %s14, 12
        %v1035 = vld [vmem:[%s1034] sm:$0xf]
        %v1036 = vpack.c.bf16 %v1011, %v1011
        %v1037 = vpack.c.bf16 %v1012, %v1012
        %v1039 = vsel %vm579, %v1035, 0
        %v1042 = vsel %vm583, %v1036, 0
        %v1045 = vsel %vm583, %v1037, 0
        %1047 = vmatprep.subr.bf16.mxu0 %v1045
        %1048 = vmatpush1.bf16.msra.mxu0 %v1042
        %1049 = vmatprep.subr.bf16.mxu0 0
        %1050 = vmatpush1.bf16.msra.mxu0 0
        %1051 = vmatprep.subr.bf16.mxu0 0
        %1052 = vmatpush1.bf16.msra.mxu0 0
        %1053 = vmatprep.subr.bf16.mxu0 0
        %1054 = vmatpush1.bf16.msra.mxu0 0
        %1055 = vmatprep.subr.bf16.mxu0 0
        %1056 = vmatpush1.bf16.msra.mxu0 0
        %1057 = vmatprep.subr.bf16.mxu0 0
        %1058 = vmatpush1.bf16.msra.mxu0 0
        %1059 = vmatprep.subr.bf16.mxu0 0
        %1060 = vmatpush1.bf16.msra.mxu0 0
        %1061 = vmatprep.subr.bf16.mxu0 0
        %1062 = vmatpush1.bf16.msra.mxu0 0
        %1063 = vmatprep.subr.bf16.mxu0 0
        %1064 = vmatpush1.bf16.msra.mxu0 0
        %1065 = vmatprep.subr.bf16.mxu0 0
        %1066 = vmatpush1.bf16.msra.mxu0 0
        %1067 = vmatprep.subr.bf16.mxu0 0
        %1068 = vmatpush1.bf16.msra.mxu0 0
        %1069 = vmatprep.subr.bf16.mxu0 0
        %1070 = vmatpush1.bf16.msra.mxu0 0
        %1071 = vmatprep.subr.bf16.mxu0 0
        %1072 = vmatpush1.bf16.msra.mxu0 0
        %1073 = vmatprep.subr.bf16.mxu0 0
        %1074 = vmatpush1.bf16.msra.mxu0 0
        %1075 = vmatprep.subr.bf16.mxu0 0
        %1076 = vmatpush1.bf16.msra.mxu0 0
        %1077 = vmatprep.subr.bf16.mxu0 0
        %1078 = vmatpush1.bf16.msra.mxu0 0
        %1079 = vmatprep.mubr.bf16.mxu0 0
        %1080 = vmatmul.mubr.bf16.gmra.mrb[0].mxu0 %v1039
        %v1081 = vpop.f32.mrb[0].mxu0
        %v1082 = vadd.f32 0.0, %v1081
        %v1083 = vpop.f32.mrb[0].mxu0
        %v1084 = vadd.f32 0.0, %v1083
        %v1085 = vpop.f32.mrb[0].mxu0
        %v1086 = vpop.f32.mrb[0].mxu0
        %1087 = vdwg.mxu0
        %v1088 = vadd.f32 %v982, %v1082
        %v1089 = vadd.f32 %v983, %v1084
        %s1090 = scalar_lea.vmem %s6, 64
        %v1091 = vld [vmem:[%s1090] sm:$0xff]
        %v1092 = vld [vmem:[%s1090 + $0x8] sm:$0xff]
        %1094 = vset.pattern.permute.xlu0 0
        %1095 = vperm.xlu0 %1094, %v1091
        %v1096 = vpop.permute.xlu0 %1095
        %1099 = vset.pattern.permute.xlu0 0
        %1100 = vperm.xlu0 %1099, %v1092
        %v1101 = vpop.permute.xlu0 %1100
        %v1103 = vmul.f32 %v665, %v1096
        %v1104 = vmul.f32 %v666, %v1096
        %v1105 = vmul.f32 %v667, %v1101
        %v1106 = vmul.f32 %v668, %v1101
        %v1107 = vadd.f32 %v1030, %v1103
        %v1108 = vadd.f32 %v1031, %v1104
        %v1109 = vadd.f32 %v1032, %v1105
        %v1110 = vadd.f32 %v1033, %v1106
        %s1111 = scalar_lea.vmem %s14, 16
        %v1112 = vld [vmem:[%s1111] sm:$0xf]
        %v1113 = vpack.c.bf16 %v537, %v537
        %v1114 = vpack.c.bf16 %v683, %v683
        %v1116 = vsel %vm579, %v1112, 0
        %v1119 = vsel %vm583, %v1113, 0
        %v1122 = vsel %vm583, %v1114, 0
        %1124 = vmatprep.subr.bf16.mxu0 %v1122
        %1125 = vmatpush1.bf16.msra.mxu0 %v1119
        %1126 = vmatprep.subr.bf16.mxu0 0
        %1127 = vmatpush1.bf16.msra.mxu0 0
        %1128 = vmatprep.subr.bf16.mxu0 0
        %1129 = vmatpush1.bf16.msra.mxu0 0
        %1130 = vmatprep.subr.bf16.mxu0 0
        %1131 = vmatpush1.bf16.msra.mxu0 0
        %1132 = vmatprep.subr.bf16.mxu0 0
        %1133 = vmatpush1.bf16.msra.mxu0 0
        %1134 = vmatprep.subr.bf16.mxu0 0
        %1135 = vmatpush1.bf16.msra.mxu0 0
        %1136 = vmatprep.subr.bf16.mxu0 0
        %1137 = vmatpush1.bf16.msra.mxu0 0
        %1138 = vmatprep.subr.bf16.mxu0 0
        %1139 = vmatpush1.bf16.msra.mxu0 0
        %1140 = vmatprep.subr.bf16.mxu0 0
        %1141 = vmatpush1.bf16.msra.mxu0 0
        %1142 = vmatprep.subr.bf16.mxu0 0
        %1143 = vmatpush1.bf16.msra.mxu0 0
        %1144 = vmatprep.subr.bf16.mxu0 0
        %1145 = vmatpush1.bf16.msra.mxu0 0
        %1146 = vmatprep.subr.bf16.mxu0 0
        %1147 = vmatpush1.bf16.msra.mxu0 0
        %1148 = vmatprep.subr.bf16.mxu0 0
        %1149 = vmatpush1.bf16.msra.mxu0 0
        %1150 = vmatprep.subr.bf16.mxu0 0
        %1151 = vmatpush1.bf16.msra.mxu0 0
        %1152 = vmatprep.subr.bf16.mxu0 0
        %1153 = vmatpush1.bf16.msra.mxu0 0
        %1154 = vmatprep.subr.bf16.mxu0 0
        %1155 = vmatpush1.bf16.msra.mxu0 0
        %1156 = vmatprep.mubr.bf16.mxu0 0
        %1157 = vmatmul.mubr.bf16.gmra.mrb[0].mxu0 %v1116
        %v1158 = vpop.f32.mrb[0].mxu0
        %v1159 = vadd.f32 0.0, %v1158
        %v1160 = vpop.f32.mrb[0].mxu0
        %v1161 = vadd.f32 0.0, %v1160
        %v1162 = vpop.f32.mrb[0].mxu0
        %v1163 = vpop.f32.mrb[0].mxu0
        %1164 = vdwg.mxu0
        %v1165 = vadd.f32 %v1088, %v1159
        %v1166 = vadd.f32 %v1089, %v1161
        %1167 = vrot.lane.b32.xlu0 %v665, 127
        %v1168 = vpop.permute.xlu0 %1167
        %1169 = vrot.lane.b32.xlu0 %v667, 127
        %v1170 = vpop.permute.xlu0 %1169
        %1171 = vrot.lane.b32.xlu0 %v666, 127
        %v1172 = vpop.permute.xlu0 %1171
        %1173 = vrot.lane.b32.xlu0 %v668, 127
        %v1174 = vpop.permute.xlu0 %1173
        %vm1175 = vcmp.lt.s32.totalorder %v495, 127
        %v1176 = vsel %vm1175, %v1168, %v1172
        %v1177 = vsel %vm1175, %v1170, %v1174
        %v1178 = vsel %vm1175, %v1172, %v1168
        %v1179 = vsel %vm1175, %v1174, %v1170
        %1180 = vrot.lane.b32.xlu0 %v537, 127
        %v1181 = vpop.permute.xlu0 %1180
        %1182 = vrot.lane.b32.xlu0 %v683, 127
        %v1183 = vpop.permute.xlu0 %1182
        %v1184 = vsel %vm1175, %v1181, %v1183
        %v1185 = vsel %vm1175, %v1183, %v1181
        %v1186 = vsel %vm527, 1, 0
        %v1187 = vsel %vm528, 1, 0
        %vm1188 = vcmp.eq.s32.totalorder %v1186, 1
        %vm1189 = vcmp.eq.s32.totalorder %v1187, 1
        %v1190 = vsel %vm1188, %v1176, 0.0
        %v1191 = vsel %vm1189, %v1178, 0.0
        %v1192 = vsel %vm1188, %v1177, 0.0
        %v1193 = vsel %vm1189, %v1179, 0.0
        %v1194 = vsel %vm1188, %v1184, 0.0
        %v1195 = vsel %vm1189, %v1185, 0.0
        %s1196 = scalar_lea.vmem %s6, 80
        %v1197 = vld [vmem:[%s1196] sm:$0xff]
        %v1198 = vld [vmem:[%s1196 + $0x8] sm:$0xff]
        %1200 = vset.pattern.permute.xlu0 0
        %1201 = vperm.xlu0 %1200, %v1197
        %v1202 = vpop.permute.xlu0 %1201
        %1205 = vset.pattern.permute.xlu0 0
        %1206 = vperm.xlu0 %1205, %v1198
        %v1207 = vpop.permute.xlu0 %1206
        %v1209 = vmul.f32 %v1190, %v1202
        %v1210 = vmul.f32 %v1191, %v1202
        %v1211 = vmul.f32 %v1192, %v1207
        %v1212 = vmul.f32 %v1193, %v1207
        %v1213 = vadd.f32 %v1107, %v1209
        %v1214 = vadd.f32 %v1108, %v1210
        %v1215 = vadd.f32 %v1109, %v1211
        %v1216 = vadd.f32 %v1110, %v1212
        %s1217 = scalar_lea.vmem %s14, 20
        %v1218 = vld [vmem:[%s1217] sm:$0xf]
        %v1219 = vpack.c.bf16 %v1194, %v1194
        %v1220 = vpack.c.bf16 %v1195, %v1195
        %v1222 = vsel %vm579, %v1218, 0
        %v1225 = vsel %vm583, %v1219, 0
        %v1228 = vsel %vm583, %v1220, 0
        %1230 = vmatprep.subr.bf16.mxu0 %v1228
        %1231 = vmatpush1.bf16.msra.mxu0 %v1225
        %1232 = vmatprep.subr.bf16.mxu0 0
        %1233 = vmatpush1.bf16.msra.mxu0 0
        %1234 = vmatprep.subr.bf16.mxu0 0
        %1235 = vmatpush1.bf16.msra.mxu0 0
        %1236 = vmatprep.subr.bf16.mxu0 0
        %1237 = vmatpush1.bf16.msra.mxu0 0
        %1238 = vmatprep.subr.bf16.mxu0 0
        %1239 = vmatpush1.bf16.msra.mxu0 0
        %1240 = vmatprep.subr.bf16.mxu0 0
        %1241 = vmatpush1.bf16.msra.mxu0 0
        %1242 = vmatprep.subr.bf16.mxu0 0
        %1243 = vmatpush1.bf16.msra.mxu0 0
        %1244 = vmatprep.subr.bf16.mxu0 0
        %1245 = vmatpush1.bf16.msra.mxu0 0
        %1246 = vmatprep.subr.bf16.mxu0 0
        %1247 = vmatpush1.bf16.msra.mxu0 0
        %1248 = vmatprep.subr.bf16.mxu0 0
        %1249 = vmatpush1.bf16.msra.mxu0 0
        %1250 = vmatprep.subr.bf16.mxu0 0
        %1251 = vmatpush1.bf16.msra.mxu0 0
        %1252 = vmatprep.subr.bf16.mxu0 0
        %1253 = vmatpush1.bf16.msra.mxu0 0
        %1254 = vmatprep.subr.bf16.mxu0 0
        %1255 = vmatpush1.bf16.msra.mxu0 0
        %1256 = vmatprep.subr.bf16.mxu0 0
        %1257 = vmatpush1.bf16.msra.mxu0 0
        %1258 = vmatprep.subr.bf16.mxu0 0
        %1259 = vmatpush1.bf16.msra.mxu0 0
        %1260 = vmatprep.subr.bf16.mxu0 0
        %1261 = vmatpush1.bf16.msra.mxu0 0
        %1262 = vmatprep.mubr.bf16.mxu0 0
        %1263 = vmatmul.mubr.bf16.gmra.mrb[0].mxu0 %v1222
        %v1264 = vpop.f32.mrb[0].mxu0
        %v1265 = vadd.f32 0.0, %v1264
        %v1266 = vpop.f32.mrb[0].mxu0
        %v1267 = vadd.f32 0.0, %v1266
        %v1268 = vpop.f32.mrb[0].mxu0
        %v1269 = vpop.f32.mrb[0].mxu0
        %1270 = vdwg.mxu0
        %v1271 = vadd.f32 %v1165, %v1265
        %v1272 = vadd.f32 %v1166, %v1267
        %1273 = vrot.lane.b32.xlu0 %v665, 113
        %v1274 = vpop.permute.xlu0 %1273
        %1275 = vrot.lane.b32.xlu0 %v667, 113
        %v1276 = vpop.permute.xlu0 %1275
        %1277 = vrot.lane.b32.xlu0 %v666, 113
        %v1278 = vpop.permute.xlu0 %1277
        %1279 = vrot.lane.b32.xlu0 %v668, 113
        %v1280 = vpop.permute.xlu0 %1279
        %vm1281 = vcmp.lt.s32.totalorder %v495, 113
        %v1282 = vsel %vm1281, %v1274, %v1278
        %v1283 = vsel %vm1281, %v1276, %v1280
        %v1284 = vsel %vm1281, %v1278, %v1274
        %v1285 = vsel %vm1281, %v1280, %v1276
        %1286 = vrot.lane.b32.xlu0 %v537, 113
        %v1287 = vpop.permute.xlu0 %1286
        %1288 = vrot.lane.b32.xlu0 %v683, 113
        %v1289 = vpop.permute.xlu0 %1288
        %v1290 = vsel %vm1281, %v1287, %v1289
        %v1291 = vsel %vm1281, %v1289, %v1287
        %v1292 = vsel %vm533, 1, 0
        %v1293 = vsel %vm534, 1, 0
        %vm1294 = vcmp.eq.s32.totalorder %v1292, 1
        %vm1295 = vcmp.eq.s32.totalorder %v1293, 1
        %v1296 = vsel %vm1294, %v1282, 0.0
        %v1297 = vsel %vm1295, %v1284, 0.0
        %v1298 = vsel %vm1294, %v1283, 0.0
        %v1299 = vsel %vm1295, %v1285, 0.0
        %v1300 = vsel %vm1294, %v1290, 0.0
        %v1301 = vsel %vm1295, %v1291, 0.0
        %s1302 = scalar_lea.vmem %s6, 96
        %v1303 = vld [vmem:[%s1302] sm:$0xff]
        %v1304 = vld [vmem:[%s1302 + $0x8] sm:$0xff]
        %1306 = vset.pattern.permute.xlu0 0
        %1307 = vperm.xlu0 %1306, %v1303
        %v1308 = vpop.permute.xlu0 %1307
        %1311 = vset.pattern.permute.xlu0 0
        %1312 = vperm.xlu0 %1311, %v1304
        %v1313 = vpop.permute.xlu0 %1312
        %v1315 = vmul.f32 %v1296, %v1308
        %v1316 = vmul.f32 %v1297, %v1308
        %v1317 = vmul.f32 %v1298, %v1313
        %v1318 = vmul.f32 %v1299, %v1313
        %v1319 = vadd.f32 %v1213, %v1315
        %v1320 = vadd.f32 %v1214, %v1316
        %v1321 = vadd.f32 %v1215, %v1317
        %v1322 = vadd.f32 %v1216, %v1318
        %s1323 = scalar_lea.vmem %s14, 24
        %v1324 = vld [vmem:[%s1323] sm:$0xf]
        %v1325 = vpack.c.bf16 %v1300, %v1300
        %v1326 = vpack.c.bf16 %v1301, %v1301
        %v1328 = vsel %vm579, %v1324, 0
        %v1331 = vsel %vm583, %v1325, 0
        %v1334 = vsel %vm583, %v1326, 0
        %1336 = vmatprep.subr.bf16.mxu0 %v1334
        %1337 = vmatpush1.bf16.msra.mxu0 %v1331
        %1338 = vmatprep.subr.bf16.mxu0 0
        %1339 = vmatpush1.bf16.msra.mxu0 0
        %1340 = vmatprep.subr.bf16.mxu0 0
        %1341 = vmatpush1.bf16.msra.mxu0 0
        %1342 = vmatprep.subr.bf16.mxu0 0
        %1343 = vmatpush1.bf16.msra.mxu0 0
        %1344 = vmatprep.subr.bf16.mxu0 0
        %1345 = vmatpush1.bf16.msra.mxu0 0
        %1346 = vmatprep.subr.bf16.mxu0 0
        %1347 = vmatpush1.bf16.msra.mxu0 0
        %1348 = vmatprep.subr.bf16.mxu0 0
        %1349 = vmatpush1.bf16.msra.mxu0 0
        %1350 = vmatprep.subr.bf16.mxu0 0
        %1351 = vmatpush1.bf16.msra.mxu0 0
        %1352 = vmatprep.subr.bf16.mxu0 0
        %1353 = vmatpush1.bf16.msra.mxu0 0
        %1354 = vmatprep.subr.bf16.mxu0 0
        %1355 = vmatpush1.bf16.msra.mxu0 0
        %1356 = vmatprep.subr.bf16.mxu0 0
        %1357 = vmatpush1.bf16.msra.mxu0 0
        %1358 = vmatprep.subr.bf16.mxu0 0
        %1359 = vmatpush1.bf16.msra.mxu0 0
        %1360 = vmatprep.subr.bf16.mxu0 0
        %1361 = vmatpush1.bf16.msra.mxu0 0
        %1362 = vmatprep.subr.bf16.mxu0 0
        %1363 = vmatpush1.bf16.msra.mxu0 0
        %1364 = vmatprep.subr.bf16.mxu0 0
        %1365 = vmatpush1.bf16.msra.mxu0 0
        %1366 = vmatprep.subr.bf16.mxu0 0
        %1367 = vmatpush1.bf16.msra.mxu0 0
        %1368 = vmatprep.mubr.bf16.mxu0 0
        %1369 = vmatmul.mubr.bf16.gmra.mrb[0].mxu0 %v1328
        %v1370 = vpop.f32.mrb[0].mxu0
        %v1371 = vadd.f32 0.0, %v1370
        %v1372 = vpop.f32.mrb[0].mxu0
        %v1373 = vadd.f32 0.0, %v1372
        %v1374 = vpop.f32.mrb[0].mxu0
        %v1375 = vpop.f32.mrb[0].mxu0
        %1376 = vdwg.mxu0
        %v1377 = vadd.f32 %v1271, %v1371
        %v1378 = vadd.f32 %v1272, %v1373
        %1379 = vrot.lane.b32.xlu0 %v665, 112
        %v1380 = vpop.permute.xlu0 %1379
        %1381 = vrot.lane.b32.xlu0 %v667, 112
        %v1382 = vpop.permute.xlu0 %1381
        %1383 = vrot.lane.b32.xlu0 %v666, 112
        %v1384 = vpop.permute.xlu0 %1383
        %1385 = vrot.lane.b32.xlu0 %v668, 112
        %v1386 = vpop.permute.xlu0 %1385
        %vm1387 = vcmp.lt.s32.totalorder %v495, 112
        %v1388 = vsel %vm1387, %v1380, %v1384
        %v1389 = vsel %vm1387, %v1382, %v1386
        %v1390 = vsel %vm1387, %v1384, %v1380
        %v1391 = vsel %vm1387, %v1386, %v1382
        %1392 = vrot.lane.b32.xlu0 %v537, 112
        %v1393 = vpop.permute.xlu0 %1392
        %1394 = vrot.lane.b32.xlu0 %v683, 112
        %v1395 = vpop.permute.xlu0 %1394
        %v1396 = vsel %vm1387, %v1393, %v1395
        %v1397 = vsel %vm1387, %v1395, %v1393
        %v1398 = vsel %vm523, 1, 0
        %v1399 = vsel %vm524, 1, 0
        %vm1400 = vcmp.eq.s32.totalorder %v1398, 1
        %vm1401 = vcmp.eq.s32.totalorder %v1399, 1
        %v1402 = vsel %vm1400, %v1388, 0.0
        %v1403 = vsel %vm1401, %v1390, 0.0
        %v1404 = vsel %vm1400, %v1389, 0.0
        %v1405 = vsel %vm1401, %v1391, 0.0
        %v1406 = vsel %vm1400, %v1396, 0.0
        %v1407 = vsel %vm1401, %v1397, 0.0
        %s1408 = scalar_lea.vmem %s6, 112
        %v1409 = vld [vmem:[%s1408] sm:$0xff]
        %v1410 = vld [vmem:[%s1408 + $0x8] sm:$0xff]
        %1412 = vset.pattern.permute.xlu0 0
        %1413 = vperm.xlu0 %1412, %v1409
        %v1414 = vpop.permute.xlu0 %1413
        %1417 = vset.pattern.permute.xlu0 0
        %1418 = vperm.xlu0 %1417, %v1410
        %v1419 = vpop.permute.xlu0 %1418
        %v1421 = vmul.f32 %v1402, %v1414
        %v1422 = vmul.f32 %v1403, %v1414
        %v1423 = vmul.f32 %v1404, %v1419
        %v1424 = vmul.f32 %v1405, %v1419
        %v1425 = vadd.f32 %v1319, %v1421
        %v1426 = vadd.f32 %v1320, %v1422
        %v1427 = vadd.f32 %v1321, %v1423
        %v1428 = vadd.f32 %v1322, %v1424
        %s1429 = scalar_lea.vmem %s14, 28
        %v1430 = vld [vmem:[%s1429] sm:$0xf]
        %v1431 = vpack.c.bf16 %v1406, %v1406
        %v1432 = vpack.c.bf16 %v1407, %v1407
        %v1434 = vsel %vm579, %v1430, 0
        %v1437 = vsel %vm583, %v1431, 0
        %v1440 = vsel %vm583, %v1432, 0
        %1442 = vmatprep.subr.bf16.mxu0 %v1440
        %1443 = vmatpush1.bf16.msra.mxu0 %v1437
        %1444 = vmatprep.subr.bf16.mxu0 0
        %1445 = vmatpush1.bf16.msra.mxu0 0
        %1446 = vmatprep.subr.bf16.mxu0 0
        %1447 = vmatpush1.bf16.msra.mxu0 0
        %1448 = vmatprep.subr.bf16.mxu0 0
        %1449 = vmatpush1.bf16.msra.mxu0 0
        %1450 = vmatprep.subr.bf16.mxu0 0
        %1451 = vmatpush1.bf16.msra.mxu0 0
        %1452 = vmatprep.subr.bf16.mxu0 0
        %1453 = vmatpush1.bf16.msra.mxu0 0
        %1454 = vmatprep.subr.bf16.mxu0 0
        %1455 = vmatpush1.bf16.msra.mxu0 0
        %1456 = vmatprep.subr.bf16.mxu0 0
        %1457 = vmatpush1.bf16.msra.mxu0 0
        %1458 = vmatprep.subr.bf16.mxu0 0
        %1459 = vmatpush1.bf16.msra.mxu0 0
        %1460 = vmatprep.subr.bf16.mxu0 0
        %1461 = vmatpush1.bf16.msra.mxu0 0
        %1462 = vmatprep.subr.bf16.mxu0 0
        %1463 = vmatpush1.bf16.msra.mxu0 0
        %1464 = vmatprep.subr.bf16.mxu0 0
        %1465 = vmatpush1.bf16.msra.mxu0 0
        %1466 = vmatprep.subr.bf16.mxu0 0
        %1467 = vmatpush1.bf16.msra.mxu0 0
        %1468 = vmatprep.subr.bf16.mxu0 0
        %1469 = vmatpush1.bf16.msra.mxu0 0
        %1470 = vmatprep.subr.bf16.mxu0 0
        %1471 = vmatpush1.bf16.msra.mxu0 0
        %1472 = vmatprep.subr.bf16.mxu0 0
        %1473 = vmatpush1.bf16.msra.mxu0 0
        %1474 = vmatprep.mubr.bf16.mxu0 0
        %1475 = vmatmul.mubr.bf16.gmra.mrb[0].mxu0 %v1434
        %v1476 = vpop.f32.mrb[0].mxu0
        %v1477 = vadd.f32 0.0, %v1476
        %v1478 = vpop.f32.mrb[0].mxu0
        %v1479 = vadd.f32 0.0, %v1478
        %v1480 = vpop.f32.mrb[0].mxu0
        %v1481 = vpop.f32.mrb[0].mxu0
        %1482 = vdwg.mxu0
        %v1483 = vadd.f32 %v1377, %v1477
        %v1484 = vadd.f32 %v1378, %v1479
        %1485 = vrot.lane.b32.xlu0 %v665, 111
        %v1486 = vpop.permute.xlu0 %1485
        %1487 = vrot.lane.b32.xlu0 %v667, 111
        %v1488 = vpop.permute.xlu0 %1487
        %1489 = vrot.lane.b32.xlu0 %v666, 111
        %v1490 = vpop.permute.xlu0 %1489
        %1491 = vrot.lane.b32.xlu0 %v668, 111
        %v1492 = vpop.permute.xlu0 %1491
        %vm1493 = vcmp.lt.s32.totalorder %v495, 111
        %v1494 = vsel %vm1493, %v1486, %v1490
        %v1495 = vsel %vm1493, %v1488, %v1492
        %v1496 = vsel %vm1493, %v1490, %v1486
        %v1497 = vsel %vm1493, %v1492, %v1488
        %1498 = vrot.lane.b32.xlu0 %v537, 111
        %v1499 = vpop.permute.xlu0 %1498
        %1500 = vrot.lane.b32.xlu0 %v683, 111
        %v1501 = vpop.permute.xlu0 %1500
        %v1502 = vsel %vm1493, %v1499, %v1501
        %v1503 = vsel %vm1493, %v1501, %v1499
        %v1504 = vsel %vm535, 1, 0
        %v1505 = vsel %vm536, 1, 0
        %vm1506 = vcmp.eq.s32.totalorder %v1504, 1
        %vm1507 = vcmp.eq.s32.totalorder %v1505, 1
        %v1508 = vsel %vm1506, %v1494, 0.0
        %v1509 = vsel %vm1507, %v1496, 0.0
        %v1510 = vsel %vm1506, %v1495, 0.0
        %v1511 = vsel %vm1507, %v1497, 0.0
        %v1512 = vsel %vm1506, %v1502, 0.0
        %v1513 = vsel %vm1507, %v1503, 0.0
        %s1514 = scalar_lea.vmem %s6, 128
        %v1515 = vld [vmem:[%s1514] sm:$0xff]
        %v1516 = vld [vmem:[%s1514 + $0x8] sm:$0xff]
        %1518 = vset.pattern.permute.xlu0 0
        %1519 = vperm.xlu0 %1518, %v1515
        %v1520 = vpop.permute.xlu0 %1519
        %1523 = vset.pattern.permute.xlu0 0
        %1524 = vperm.xlu0 %1523, %v1516
        %v1525 = vpop.permute.xlu0 %1524
        %v1527 = vmul.f32 %v1508, %v1520
        %v1528 = vmul.f32 %v1509, %v1520
        %v1529 = vmul.f32 %v1510, %v1525
        %v1530 = vmul.f32 %v1511, %v1525
        %v1531 = vadd.f32 %v1425, %v1527
        %v1532 = vadd.f32 %v1426, %v1528
        %v1533 = vadd.f32 %v1427, %v1529
        %v1534 = vadd.f32 %v1428, %v1530
        %s1535 = scalar_lea.vmem %s14, 32
        %v1536 = vld [vmem:[%s1535] sm:$0xf]
        %v1537 = vpack.c.bf16 %v1512, %v1512
        %v1538 = vpack.c.bf16 %v1513, %v1513
        %v1540 = vsel %vm579, %v1536, 0
        %v1543 = vsel %vm583, %v1537, 0
        %v1546 = vsel %vm583, %v1538, 0
        %1548 = vmatprep.subr.bf16.mxu0 %v1546
        %1549 = vmatpush1.bf16.msra.mxu0 %v1543
        %1550 = vmatprep.subr.bf16.mxu0 0
        %1551 = vmatpush1.bf16.msra.mxu0 0
        %1552 = vmatprep.subr.bf16.mxu0 0
        %1553 = vmatpush1.bf16.msra.mxu0 0
        %1554 = vmatprep.subr.bf16.mxu0 0
        %1555 = vmatpush1.bf16.msra.mxu0 0
        %1556 = vmatprep.subr.bf16.mxu0 0
        %1557 = vmatpush1.bf16.msra.mxu0 0
        %1558 = vmatprep.subr.bf16.mxu0 0
        %1559 = vmatpush1.bf16.msra.mxu0 0
        %1560 = vmatprep.subr.bf16.mxu0 0
        %1561 = vmatpush1.bf16.msra.mxu0 0
        %1562 = vmatprep.subr.bf16.mxu0 0
        %1563 = vmatpush1.bf16.msra.mxu0 0
        %1564 = vmatprep.subr.bf16.mxu0 0
        %1565 = vmatpush1.bf16.msra.mxu0 0
        %1566 = vmatprep.subr.bf16.mxu0 0
        %1567 = vmatpush1.bf16.msra.mxu0 0
        %1568 = vmatprep.subr.bf16.mxu0 0
        %1569 = vmatpush1.bf16.msra.mxu0 0
        %1570 = vmatprep.subr.bf16.mxu0 0
        %1571 = vmatpush1.bf16.msra.mxu0 0
        %1572 = vmatprep.subr.bf16.mxu0 0
        %1573 = vmatpush1.bf16.msra.mxu0 0
        %1574 = vmatprep.subr.bf16.mxu0 0
        %1575 = vmatpush1.bf16.msra.mxu0 0
        %1576 = vmatprep.subr.bf16.mxu0 0
        %1577 = vmatpush1.bf16.msra.mxu0 0
        %1578 = vmatprep.subr.bf16.mxu0 0
        %1579 = vmatpush1.bf16.msra.mxu0 0
        %1580 = vmatprep.mubr.bf16.mxu0 0
        %1581 = vmatmul.mubr.bf16.gmra.mrb[0].mxu0 %v1540
        %v1582 = vpop.f32.mrb[0].mxu0
        %v1583 = vadd.f32 0.0, %v1582
        %v1584 = vpop.f32.mrb[0].mxu0
        %v1585 = vadd.f32 0.0, %v1584
        %v1586 = vpop.f32.mrb[0].mxu0
        %v1587 = vpop.f32.mrb[0].mxu0
        %1588 = vdwg.mxu0
        %v1589 = vadd.f32 %v1483, %v1583
        %v1590 = vadd.f32 %v1484, %v1585
        %v1591 = vadd.f32 %v1531, %v1532
        %1592 = vadd.xlane.f32.xlu0 %v1591
        %v1593 = vpop.xlane.xlu0 %1592
        %v1594 = vadd.f32 %v1533, %v1534
        %1595 = vadd.xlane.f32.xlu0 %v1594
        %v1596 = vpop.xlane.xlu0 %1595
        %v1597 = vrcp.pop 256.0
        %v1598 = vmul.f32 %v1593, %v1597
        %v1599 = vmul.f32 %v1596, %v1597
        %v1600 = vld [vmem:[%s7] sm:$0xff]
        %v1601 = vld [vmem:[%s7 + $0x8] sm:$0xff]
        %v1602 = vmul.f32 %v1600, %v1598
        %v1603 = vmul.f32 %v1601, %v1599
        %v1604 = vsel %vm579, %v1602, 0.0
        %v1605 = vsel %vm579, %v1603, 0.0
        %v1606 = vadd.f32 %v1604, %v1605
        %v1607 = vrot.slane %v1606, 4
        %v1608 = vadd.f32 %v1606, %v1607
        %v1609 = vrot.slane %v1608, 2
        %v1610 = vadd.f32 %v1608, %v1609
        %v1611 = vrot.slane %v1610, 1
        %v1612 = vadd.f32 %v1610, %v1611
        %v1613 = vld [vmem:[%s8] sm:$0x1]
        %v1614 = vadd.f32 %v1612, %v1613
        %v1615 = vmax.f32 %v1614, 0.0
        %v1616 = vld [vmem:[%s9] sm:$0xff]
        %v1617 = vld [vmem:[%s9 + $0x8] sm:$0xff]
        %v1618 = vlaneseq
        %v1619 = vshrl.u32 %v1618, 7
        %v1620 = vsub.s32 0, %v1619
        %v1621 = vrot.slane %v1615, %v1620
        %v1622 = vmul.f32 %v1616, %v1621
        %v1623 = vmul.f32 %v1617, %v1621
        %v1624 = vsel %vm579, %v1622, 0.0
        %1625 = vadd.xlane.f32.xlu0 %v1624
        %v1626 = vpop.xlane.xlu0 %1625
        %v1627 = vsel %vm579, %v1623, 0.0
        %1628 = vadd.xlane.f32.xlu0 %v1627
        %v1629 = vpop.xlane.xlu0 %1628
        %v1630 = vld [vmem:[%s10] sm:$0xff]
        %v1631 = vld [vmem:[%s10 + $0x8] sm:$0xff]
        %v1632 = vadd.f32 %v1626, %v1630
        %v1633 = vadd.f32 %v1629, %v1631
        %v1634 = vxor.u32 %v1632, 2147483648
        %v1635 = vxor.u32 %v1633, 2147483648
        %v1636 = vmul.f32 %v1634, 1.442695
        %v1637 = vpow.pop %v1636
        %v1638 = vmul.f32 %v1635, 1.442695
        %v1639 = vpow.pop %v1638
        %v1640 = vadd.f32 %v1637, 1.0
        %v1641 = vadd.f32 %v1639, 1.0
        %v1642 = vrcp.pop %v1640
        %v1643 = vmul.f32 1.0, %v1642
        %v1644 = vrcp.pop %v1641
        %v1645 = vmul.f32 1.0, %v1644
        %1647 = vset.pattern.permute.xlu0 0
        %1648 = vperm.xlu0 %1647, %v1643
        %v1649 = vpop.permute.xlu0 %1648
        %1652 = vset.pattern.permute.xlu0 0
        %1653 = vperm.xlu0 %1652, %v1645
        %v1654 = vpop.permute.xlu0 %1653
        %v1656 = vmul.f32 %v1531, %v1649
        %v1657 = vmul.f32 %v1532, %v1649
        %v1658 = vmul.f32 %v1533, %v1654
        %v1659 = vmul.f32 %v1534, %v1654
        %v1660 = vld [vmem:[%s11] sm:$0xff]
        %v1661 = vld [vmem:[%s11 + $0x8] sm:$0xff]
        %1663 = vset.pattern.permute.xlu0 0
        %1664 = vperm.xlu0 %1663, %v1660
        %v1665 = vpop.permute.xlu0 %1664
        %1668 = vset.pattern.permute.xlu0 0
        %1669 = vperm.xlu0 %1668, %v1661
        %v1670 = vpop.permute.xlu0 %1669
        %v1672 = vmul.f32 %v1656, %v1665
        %v1673 = vmul.f32 %v1657, %v1665
        %v1674 = vmul.f32 %v1658, %v1670
        %v1675 = vmul.f32 %v1659, %v1670
        %v1676 = vld [vmem:[%s12] sm:$0xff]
        %v1677 = vld [vmem:[%s12 + $0x8] sm:$0xff]
        %1679 = vset.pattern.permute.xlu0 0
        %1680 = vperm.xlu0 %1679, %v1676
        %v1681 = vpop.permute.xlu0 %1680
        %1684 = vset.pattern.permute.xlu0 0
        %1685 = vperm.xlu0 %1684, %v1677
        %v1686 = vpop.permute.xlu0 %1685
        %v1688 = vadd.f32 %v1672, %v1681
        %v1689 = vadd.f32 %v1673, %v1681
        %v1690 = vadd.f32 %v1674, %v1686
        %v1691 = vadd.f32 %v1675, %v1686
        %v1692 = vld [vmem:[%s13] sm:$0xf]
        %v1693 = vpack.c.bf16 %v1690, %v1688
        %v1694 = vpack.c.bf16 %v1691, %v1689
        %vm1695 = vcmask 130048
        %v1697 = vsel %vm1695, %v1692, 0
        %1699 = vmatprep.subr.bf16.mxu0 %v1694
        %1700 = vmatpush1.bf16.msra.mxu0 %v1693
        %1701 = vmatprep.subr.bf16.mxu0 0
        %1702 = vmatpush1.bf16.msra.mxu0 0
        %1703 = vmatprep.subr.bf16.mxu0 0
        %1704 = vmatpush1.bf16.msra.mxu0 0
        %1705 = vmatprep.subr.bf16.mxu0 0
        %1706 = vmatpush1.bf16.msra.mxu0 0
        %1707 = vmatprep.subr.bf16.mxu0 0
        %1708 = vmatpush1.bf16.msra.mxu0 0
        %1709 = vmatprep.subr.bf16.mxu0 0
        %1710 = vmatpush1.bf16.msra.mxu0 0
        %1711 = vmatprep.subr.bf16.mxu0 0
        %1712 = vmatpush1.bf16.msra.mxu0 0
        %1713 = vmatprep.subr.bf16.mxu0 0
        %1714 = vmatpush1.bf16.msra.mxu0 0
        %1715 = vmatprep.subr.bf16.mxu0 0
        %1716 = vmatpush1.bf16.msra.mxu0 0
        %1717 = vmatprep.subr.bf16.mxu0 0
        %1718 = vmatpush1.bf16.msra.mxu0 0
        %1719 = vmatprep.subr.bf16.mxu0 0
        %1720 = vmatpush1.bf16.msra.mxu0 0
        %1721 = vmatprep.subr.bf16.mxu0 0
        %1722 = vmatpush1.bf16.msra.mxu0 0
        %1723 = vmatprep.subr.bf16.mxu0 0
        %1724 = vmatpush1.bf16.msra.mxu0 0
        %1725 = vmatprep.subr.bf16.mxu0 0
        %1726 = vmatpush1.bf16.msra.mxu0 0
        %1727 = vmatprep.subr.bf16.mxu0 0
        %1728 = vmatpush1.bf16.msra.mxu0 0
        %1729 = vmatprep.subr.bf16.mxu0 0
        %1730 = vmatpush1.bf16.msra.mxu0 0
        %1731 = vmatprep.mubr.bf16.mxu0 0
        %1732 = vmatmul.mubr.bf16.gmra.mrb[0].mxu0 %v1697
        %v1733 = vpop.f32.mrb[0].mxu0
        %v1734 = vadd.f32 %v1589, %v1733
        %v1735 = vpop.f32.mrb[0].mxu0
        %v1736 = vadd.f32 %v1590, %v1735
        %v1737 = vpop.f32.mrb[0].mxu0
        %v1738 = vpop.f32.mrb[0].mxu0
        %1739 = vdwg.mxu0
        %1740 = vst [vmem:[%s487] sm:$0xff] %v1734
        %1741 = vst [vmem:[%s487 + $0x8] sm:$0xff] %v1736
        %s1742 = sand.u32 %s357, 1
        %s1743 = scalar_lea.sflag [#allocation3], %s1742
        %s1744 = sand.u32 %s357, 1
        %s1745 = smul.addr %s1744, 16
        %s1746 = scalar_lea.vmem [#allocation2], %s1745
        // Predicated region
        $region81: #{tpu_custom_call.1} parent=79 // pred_check
          %p1747 = pneg %p367
        $region82: #{tpu_custom_call.1} parent=79 // pred_check_branch
          %1749 = sbr.rel (%p1747) target = $region84
        $region83: #{tpu_custom_call.1} parent=79 // pred_region
          %s1751 = ssub.s32 256, 256
          %1752 = vsyncadd %s1743, %s1751
          %s1753 = smul.addr %s29, 2
          %s1754 = smul.addr %s1753, 128
          %s1755 = scalar_lea.hbm %s15, %s1754
          %s1757 = sshll.u32 %s1746, 4
          %s1758 = int_to_ptr.vmem [resolvable:$true] %s1757
          %1760 = dma.vmem_to_hbm [thread:$0]  %s1758, 256, %s1755, %s1743
        $region84: #{tpu_custom_call.1} parent=79 // pred_fallthru
          _
      $region80: #{tpu_custom_call.1} parent=5 // pred_fallthru
        _
      %p1761 = scmp.le.s32.totalorder 2, %s24
      // Predicated region
      $region85: #{tpu_custom_call.1} parent=5 // pred_check
        %p1762 = pneg %p1761
      $region86: #{tpu_custom_call.1} parent=5 // pred_check_branch
        %1764 = sbr.rel (%p1762) target = $region88
      $region87: #{tpu_custom_call.1} parent=5 // pred_region
        %s1765 = ssub.s32 %s24, 2
        // Predicated region
        $region89: #{tpu_custom_call.1} parent=87 // pred_check
          %p1766 = pneg %p373
        $region90: #{tpu_custom_call.1} parent=87 // pred_check_branch
          %1768 = sbr.rel (%p1766) target = $region92
        $region91: #{tpu_custom_call.1} parent=87 // pred_region
          %s1769 = sand.u32 %s358, 1
          %s1770 = scalar_lea.sflag [#allocation3], %s1769
          %s1771 = sand.u32 %s358, 1
          %s1772 = smul.addr %s1771, 16
          %s1773 = scalar_lea.vmem [#allocation2], %s1772
          %1774 = dma.done %s1770, 256
        $region92: #{tpu_custom_call.1} parent=87 // pred_fallthru
          _
      $region88: #{tpu_custom_call.1} parent=5 // pred_fallthru
        _
    $region6: #{tpu_custom_call.1} parent=1 // loop_footer
      %s28 = sadd.s32 1, %s24
    $region7: #{tpu_custom_call.1} parent=1 // loop_footer_branch
      %23 = sbr.rel target = $region3
    $region8: #{tpu_custom_call.1} parent=1 // loop_exit
      _
    %1775 = vsyncpa [#allocation3], 1
    %s1776 = scalar_lea.sflag [#allocation3], 1
    %1777 = vsyncpa %s1776, 1

</llo_original>
